<compile_context>
chip_gen: v5e
topology: v5e:2x2
jax: 0.10.0
libtpu: 0.0.40
codegen_flags: <defaults>
</compile_context>

<pallas_src>
import functools

import jax
import jax.numpy as jnp
import numpy as np
from jax.experimental import pallas as pl
from jax.experimental.pallas import tpu as pltpu


def _attention_kernel(x_ref, wqkv_ref, wo_ref, b_ref, o_ref,
                      *, num_heads, compute_dtype):
    """Fused MHSA for one batch element.

    x_ref    : (1, N, C)     input tokens (f32)
    wqkv_ref : (3H, C, hd)   stacked per-head q/k/v weights (q pre-scaled, bf16)
    wo_ref   : (H, hd, C)    per-head output-projection weights (bf16)
    b_ref    : (1, C)        output-projection bias (f32)
    o_ref    : (1, N, C)     output tokens
    """
    nh = num_heads
    n3h = wqkv_ref.shape[0]
    _, n_tok, c_dim = x_ref.shape

    x = x_ref[0].astype(compute_dtype)                         # (N, C)
    # Heads as a dot_general batch dim: cheap leading-axis replication, no
    # lane slicing / relayout anywhere downstream.
    xh = jnp.broadcast_to(x, (n3h, n_tok, c_dim))               # (3H, N, C)

    # Single batched MXU push for the whole qkv projection.
    dn_proj = (((2,), (1,)), ((0,), (0,)))                      # contract C, batch over heads
    qkv = jax.lax.dot_general(xh, wqkv_ref[...], dn_proj,
                              preferred_element_type=jnp.float32)   # (3H, N, hd)
    q = qkv[0 * nh:1 * nh]                                      # (H, N, hd), pre-scaled
    k = qkv[1 * nh:2 * nh]                                      # (H, N, hd)
    v = qkv[2 * nh:3 * nh]                                      # (H, N, hd)

    # Attention scores: contract head_dim of q and k directly (no explicit k.T).
    dn_qk = (((2,), (2,)), ((0,), (0,)))
    s = jax.lax.dot_general(q.astype(compute_dtype), k.astype(compute_dtype),
                            dn_qk, preferred_element_type=jnp.float32)    # (H, N, N)

    # Softmax in f32 (attn_drop is identity: p=0.0 / eval mode).
    s = s - jnp.max(s, axis=-1, keepdims=True)
    p = jnp.exp(s)
    p = p * pl.reciprocal(jnp.sum(p, axis=-1, keepdims=True), approx=True)

    # attn @ v, batched over heads.
    dn_pv = (((2,), (1,)), ((0,), (0,)))
    ho = jax.lax.dot_general(p.astype(compute_dtype), v.astype(compute_dtype),
                             dn_pv, preferred_element_type=jnp.float32)   # (H, N, hd)

    # Output projection with the head concat folded in: per-head partial
    # projections (batched over heads), then a cheap VPU sum over the head axis.
    dn_o = (((2,), (1,)), ((0,), (0,)))
    partial = jax.lax.dot_general(ho.astype(compute_dtype), wo_ref[...],
                                  dn_o, preferred_element_type=jnp.float32)  # (H, N, C)
    out = jnp.sum(partial, axis=0) + b_ref[...]                               # (N, C)

    # proj_drop is identity (p=0.0 / eval mode).
    o_ref[0] = out.astype(o_ref.dtype)


def attention_v2_pallas(x, wqkv_t, wproj_t, bproj, *, num_heads,
                        compute_dtype=jnp.bfloat16):
    """Forward pass of Attention_v2.

    x can be [B, N, C] or [B, C, H, W] (like the PyTorch module).
    wqkv_t : (C, 3C)  = qkv.weight.T
    wproj_t: (C, C)   = proj.weight.T
    bproj  : (C,)     = proj.bias
    """
    orig_shape = x.shape
    is_4d = (x.ndim == 4)
    if is_4d:
        B, C, H, W = x.shape
        x = x.reshape(B, C, H * W).transpose(0, 2, 1)              # [B, N, C]
    B, N, C = x.shape
    head_dim = C // num_heads
    scale = float(head_dim) ** -0.5

    # Pre-split / reshape the weights so the head axis is a leading batch axis
    # inside the kernel (columns of wqkv_t are laid out as [3, H, hd]).
    wq = wqkv_t[:, 0 * C:1 * C].reshape(C, num_heads, head_dim).transpose(1, 0, 2)
    wk = wqkv_t[:, 1 * C:2 * C].reshape(C, num_heads, head_dim).transpose(1, 0, 2)
    wv = wqkv_t[:, 2 * C:3 * C].reshape(C, num_heads, head_dim).transpose(1, 0, 2)
    wq = wq * scale                                   # fold softmax scale into q-projection
    wqkv = jnp.concatenate([wq, wk, wv], axis=0)      # (3H, C, hd)
    wo = wproj_t.reshape(num_heads, head_dim, C)      # (H, hd, C)

    # Supply MXU operands (weights) in the compute dtype; bias stays f32.
    wqkv = wqkv.astype(compute_dtype)
    wo = wo.astype(compute_dtype)
    b2 = bproj.reshape(1, C).astype(jnp.float32)

    kernel = functools.partial(_attention_kernel, num_heads=num_heads,
                               compute_dtype=compute_dtype)

    out = pl.pallas_call(
        kernel,
        out_shape=jax.ShapeDtypeStruct((B, N, C), x.dtype),
        grid=(B,),
        in_specs=[
            pl.BlockSpec((1, N, C), lambda b: (b, 0, 0)),                     # x (per batch)
            pl.BlockSpec((3 * num_heads, C, head_dim), lambda b: (0, 0, 0)),  # wqkv (shared)
            pl.BlockSpec((num_heads, head_dim, C), lambda b: (0, 0, 0)),      # wproj (shared)
            pl.BlockSpec((1, C), lambda b: (0, 0)),                           # proj bias (shared)
        ],
        out_specs=pl.BlockSpec((1, N, C), lambda b: (b, 0, 0)),
        compiler_params=pltpu.CompilerParams(
            dimension_semantics=("parallel",)),
    )(x, wqkv, wo, b2)

    if is_4d:
        B_, C_, H_, W_ = orig_shape
        out = out.transpose(0, 2, 1).reshape(B_, C_, H_, W_)
    return out


def attention_v2_reference(x, wqkv_t, wproj_t, bproj, *, num_heads):
    """Pure-JAX f32 reference mirroring the PyTorch forward exactly."""
    orig_shape = x.shape
    is_4d = (x.ndim == 4)
    if is_4d:
        B, C, H, W = x.shape
        x = x.reshape(B, C, H * W).transpose(0, 2, 1)
    B, N, C = x.shape
    head_dim = C // num_heads
    scale = head_dim ** -0.5

    qkv = x @ wqkv_t                                               # (B, N, 3C)
    qkv = qkv.reshape(B, N, 3, num_heads, head_dim).transpose(2, 0, 3, 1, 4)
    q, k, v = qkv[0], qkv[1], qkv[2]                               # (B, H, N, hd)
    attn = (q @ jnp.swapaxes(k, -2, -1)) * scale                   # (B, H, N, N)
    attn = jax.nn.softmax(attn, axis=-1)
    out = (attn @ v)                                               # (B, H, N, hd)
    out = out.transpose(0, 2, 1, 3).reshape(B, N, C)
    out = out @ wproj_t + bproj

    if is_4d:
        B_, C_, H_, W_ = orig_shape
        out = out.transpose(0, 2, 1).reshape(B_, C_, H_, W_)
    return out


if __name__ == "__main__":
    # Small, module-consistent shapes: dim=32 divisible by num_heads=4.
    B, C, H, W = 2, 32, 8, 8
    num_heads = 4

    key = jax.random.PRNGKey(0)
    kx, kqkv, kproj, kb = jax.random.split(key, 4)

    x = jax.random.normal(kx, (B, C, H, W), dtype=jnp.float32)
    # Deterministic parameter init (qkv_bias=False; proj has bias).
    wqkv_t = jax.random.normal(kqkv, (C, 3 * C), dtype=jnp.float32) * 0.05   # qkv.weight.T
    wproj_t = jax.random.normal(kproj, (C, C), dtype=jnp.float32) * 0.05     # proj.weight.T
    bproj = jax.random.normal(kb, (C,), dtype=jnp.float32) * 0.05            # proj.bias
    # TODO(synk): nn.Dropout layers are identity here (p=0.0 / eval mode), so no dropout kernel.

    out = attention_v2_pallas(x, wqkv_t, wproj_t, bproj, num_heads=num_heads)
    out = jax.block_until_ready(out)

    ref = attention_v2_reference(x, wqkv_t, wproj_t, bproj, num_heads=num_heads)
    # bf16 MXU operands with f32 accumulation -> loosened tolerance vs the f32 reference.
    np.testing.assert_allclose(np.asarray(out), np.asarray(ref), rtol=2e-2, atol=2e-2)

    print("KERNEL_OK")
</pallas_src>

<mosaic_0001>
module attributes {stable_mosaic.version = 11 : i64} {
  func.func @_attention_kernel(%arg0: i32, %arg1: memref<1x64x32xf32, #tpu.memory_space<vmem>>, %arg2: memref<12x32x8xbf16, #tpu.memory_space<vmem>>, %arg3: memref<4x8x32xbf16, #tpu.memory_space<vmem>>, %arg4: memref<1x32xf32, #tpu.memory_space<vmem>>, %arg5: memref<1x64x32xf32, #tpu.memory_space<vmem>>) attributes {dimension_semantics = [#tpu.dimension_semantics<parallel>], iteration_bounds = array<i64: 2>, scalar_prefetch = 0 : i64, scratch_operands = 0 : i64, tpu.core_type = #tpu.core_type<tc>, window_params = [{transform_indices = @transform_0, window_bounds = array<i64: 1, 64, 32>}, {pipeline_mode = #tpu.pipeline_mode<synchronous>, transform_indices = @transform_1, window_bounds = array<i64: 12, 32, 8>}, {pipeline_mode = #tpu.pipeline_mode<synchronous>, transform_indices = @transform_2, window_bounds = array<i64: 4, 8, 32>}, {pipeline_mode = #tpu.pipeline_mode<synchronous>, transform_indices = @transform_3, window_bounds = array<i64: 1, 32>}, {transform_indices = @transform_4, window_bounds = array<i64: 1, 64, 32>}]} {
    %c0 = arith.constant 0 : index
    %c0_0 = arith.constant 0 : index
    %c0_1 = arith.constant 0 : index
    %0 = vector.load %arg1[%c0, %c0_0, %c0_1] : memref<1x64x32xf32, #tpu.memory_space<vmem>>, vector<1x64x32xf32>
    %1 = vector.shape_cast %0 : vector<1x64x32xf32> to vector<64x32xf32>
    %2 = arith.truncf %1 : vector<64x32xf32> to vector<64x32xbf16>
    %3 = vector.shape_cast %2 : vector<64x32xbf16> to vector<1x64x32xbf16>
    %4 = vector.broadcast %3 : vector<1x64x32xbf16> to vector<12x64x32xbf16>
    %c0_2 = arith.constant 0 : index
    %c0_3 = arith.constant 0 : index
    %c0_4 = arith.constant 0 : index
    %5 = vector.load %arg2[%c0_2, %c0_3, %c0_4] : memref<12x32x8xbf16, #tpu.memory_space<vmem>>, vector<12x32x8xbf16>
    %cst = arith.constant dense<0.000000e+00> : vector<12x64x8xf32>
    %6 = tpu.matmul %4, %5, %cst {dimension_numbers = #tpu.dot_dimension_numbers<[2], [1], [1], [2], [0, 0, 0, 1, 1, 2], [0], [0]>} : vector<12x64x32xbf16>, vector<12x32x8xbf16>, vector<12x64x8xf32> -> vector<12x64x8xf32>
    %7 = vector.extract_strided_slice %6 {offsets = [0, 0, 0], sizes = [4, 64, 8], strides = [1, 1, 1]} : vector<12x64x8xf32> to vector<4x64x8xf32>
    %8 = vector.extract_strided_slice %6 {offsets = [4, 0, 0], sizes = [4, 64, 8], strides = [1, 1, 1]} : vector<12x64x8xf32> to vector<4x64x8xf32>
    %9 = vector.extract_strided_slice %6 {offsets = [8, 0, 0], sizes = [4, 64, 8], strides = [1, 1, 1]} : vector<12x64x8xf32> to vector<4x64x8xf32>
    %10 = arith.truncf %7 : vector<4x64x8xf32> to vector<4x64x8xbf16>
    %11 = arith.truncf %8 : vector<4x64x8xf32> to vector<4x64x8xbf16>
    %cst_5 = arith.constant dense<0.000000e+00> : vector<4x64x64xf32>
    %12 = tpu.matmul %10, %11, %cst_5 {dimension_numbers = #tpu.dot_dimension_numbers<[2], [2], [1], [1], [0, 0, 0, 1, 1, 1], [0], [0]>} : vector<4x64x8xbf16>, vector<4x64x8xbf16>, vector<4x64x64xf32> -> vector<4x64x64xf32>
    %cst_6 = arith.constant dense<0xFF800000> : vector<4x64xf32>
    %13 = vector.multi_reduction <maximumf>, %12, %cst_6 [2] : vector<4x64x64xf32> to vector<4x64xf32>
    %14 = vector.shape_cast %13 : vector<4x64xf32> to vector<4x64x1xf32>
    %15 = vector.broadcast %14 : vector<4x64x1xf32> to vector<4x64x64xf32>
    %16 = arith.subf %12, %15 : vector<4x64x64xf32>
    %17 = math.exp %16 : vector<4x64x64xf32>
    %cst_7 = arith.constant dense<0.000000e+00> : vector<4x64xf32>
    %18 = vector.multi_reduction <add>, %17, %cst_7 [2] : vector<4x64x64xf32> to vector<4x64xf32>
    %19 = vector.shape_cast %18 : vector<4x64xf32> to vector<4x64x1xf32>
    %20 = tpu.reciprocal %19 {approx = true} : vector<4x64x1xf32> -> vector<4x64x1xf32>
    %21 = vector.broadcast %20 : vector<4x64x1xf32> to vector<4x64x64xf32>
    %22 = arith.mulf %17, %21 : vector<4x64x64xf32>
    %23 = arith.truncf %22 : vector<4x64x64xf32> to vector<4x64x64xbf16>
    %24 = arith.truncf %9 : vector<4x64x8xf32> to vector<4x64x8xbf16>
    %cst_8 = arith.constant dense<0.000000e+00> : vector<4x64x8xf32>
    %25 = tpu.matmul %23, %24, %cst_8 {dimension_numbers = #tpu.dot_dimension_numbers<[2], [1], [1], [2], [0, 0, 0, 1, 1, 2], [0], [0]>} : vector<4x64x64xbf16>, vector<4x64x8xbf16>, vector<4x64x8xf32> -> vector<4x64x8xf32>
    %26 = arith.truncf %25 : vector<4x64x8xf32> to vector<4x64x8xbf16>
    %c0_9 = arith.constant 0 : index
    %c0_10 = arith.constant 0 : index
    %c0_11 = arith.constant 0 : index
    %27 = vector.load %arg3[%c0_9, %c0_10, %c0_11] : memref<4x8x32xbf16, #tpu.memory_space<vmem>>, vector<4x8x32xbf16>
    %cst_12 = arith.constant dense<0.000000e+00> : vector<4x64x32xf32>
    %28 = tpu.matmul %26, %27, %cst_12 {dimension_numbers = #tpu.dot_dimension_numbers<[2], [1], [1], [2], [0, 0, 0, 1, 1, 2], [0], [0]>} : vector<4x64x8xbf16>, vector<4x8x32xbf16>, vector<4x64x32xf32> -> vector<4x64x32xf32>
    %cst_13 = arith.constant dense<0.000000e+00> : vector<64x32xf32>
    %29 = vector.multi_reduction <add>, %28, %cst_13 [0] : vector<4x64x32xf32> to vector<64x32xf32>
    %c0_14 = arith.constant 0 : index
    %c0_15 = arith.constant 0 : index
    %30 = vector.load %arg4[%c0_14, %c0_15] : memref<1x32xf32, #tpu.memory_space<vmem>>, vector<1x32xf32>
    %31 = vector.broadcast %30 : vector<1x32xf32> to vector<64x32xf32>
    %32 = arith.addf %29, %31 : vector<64x32xf32>
    %c0_16 = arith.constant 0 : index
    %c0_17 = arith.constant 0 : index
    %c0_18 = arith.constant 0 : index
    %33 = vector.load %arg5[%c0_16, %c0_17, %c0_18] : memref<1x64x32xf32, #tpu.memory_space<vmem>>, vector<1x64x32xf32>
    %34 = vector.shape_cast %33 : vector<1x64x32xf32> to vector<64x32xf32>
    %35 = vector.shape_cast %32 : vector<64x32xf32> to vector<1x64x32xf32>
    tpu.vector_store %arg5[%c0_16, %c0_17, %c0_18], %35 {strides = array<i32>} : memref<1x64x32xf32, #tpu.memory_space<vmem>>, vector<1x64x32xf32>,
    return
  }
  func.func @transform_0(%arg0: i32) -> (i32, i32, i32) {
    %c0_i32 = arith.constant 0 : i32
    %c0_i32_0 = arith.constant 0 : i32
    %c0_i32_1 = arith.constant 0 : i32
    return %arg0, %c0_i32, %c0_i32_0 : i32, i32, i32
  }
  func.func @transform_1(%arg0: i32) -> (i32, i32, i32) {
    %c0_i32 = arith.constant 0 : i32
    %c0_i32_0 = arith.constant 0 : i32
    %c0_i32_1 = arith.constant 0 : i32
    %c0_i32_2 = arith.constant 0 : i32
    return %c0_i32, %c0_i32_0, %c0_i32_1 : i32, i32, i32
  }
  func.func @transform_2(%arg0: i32) -> (i32, i32, i32) {
    %c0_i32 = arith.constant 0 : i32
    %c0_i32_0 = arith.constant 0 : i32
    %c0_i32_1 = arith.constant 0 : i32
    %c0_i32_2 = arith.constant 0 : i32
    return %c0_i32, %c0_i32_0, %c0_i32_1 : i32, i32, i32
  }
  func.func @transform_3(%arg0: i32) -> (i32, i32) {
    %c0_i32 = arith.constant 0 : i32
    %c0_i32_0 = arith.constant 0 : i32
    %c0_i32_1 = arith.constant 0 : i32
    return %c0_i32, %c0_i32_0 : i32, i32
  }
  func.func @transform_4(%arg0: i32) -> (i32, i32, i32) {
    %c0_i32 = arith.constant 0 : i32
    %c0_i32_0 = arith.constant 0 : i32
    %c0_i32_1 = arith.constant 0 : i32
    return %arg0, %c0_i32, %c0_i32_0 : i32, i32, i32
  }
}

</mosaic_0001>

<llo_original>
// kernel: tpu_custom_call.1
$region0: #{tpu_custom_call.1}
  #allocation0 [shape = 'u32[]', space=smem, size = 0x4, offset = 0x4, fixed_abs, tag = 'smem constant byte address 0x4 - core index']
  #allocation1 [shape = 'u32[72,128]{1,0:T(1,128)}', space=vmem, size = 0x9000, scoped, tag = 'internal scratch']
  %s0 = inlined_call_operand.vmem [shape: f32[2,64,32], index: 0, kind: input, shape index: {}]
  %s1 = inlined_call_operand.vmem [shape: bf16[12,32,8], index: 1, kind: input, shape index: {}]
  %s2 = inlined_call_operand.vmem [shape: bf16[4,8,32], index: 2, kind: input, shape index: {}]
  %s3 = inlined_call_operand.vmem [shape: f32[1,32], index: 3, kind: input, shape index: {}]
  %s4 = inlined_call_operand.vmem [shape: f32[2,64,32], index: 4, kind: output, shape index: {}]
  %s5 = sld [smem:[#allocation0]]
  $region49: #{tpu_custom_call.1} parent=0
    _
  %s7 = ssub.s32 1, %s5
  %s8 = scalar_select 0, %s7, %s5
  loop: start=0, step=1, limit=4
  $region2: #{tpu_custom_call.1} parent=0 // loop_pre_header
    _
  $region3: #{tpu_custom_call.1} parent=0 // loop_header
    %s10 = sphi 0, %s14
    %p11 = scmp.ge.s32.totalorder %s10, 4
    %s20 = sphi 0, %s22
    %s23 = sphi 0, %s20
    %s24 = sphi 0, %s23
    %s40 = sphi 0, %s24
    %s44 = sphi 0, %s44
    %s46 = sphi 0, %s44
    %s47 = sphi 0, %s46
    %s61 = sphi 0, %s47
    %s65 = sphi 0, %s65
    %s67 = sphi 0, %s65
    %s68 = sphi 0, %s67
    %s82 = sphi 0, %s68
    %s86 = sphi 0, %s86
    %s88 = sphi 0, %s86
    %s89 = sphi 0, %s88
    %s103 = sphi 0, %s89
    %s109 = sphi 0, %s111
    %s112 = sphi 0, %s109
    %s113 = sphi 0, %s112
    %s129 = sphi 0, %s113
  $region4: #{tpu_custom_call.1} parent=0 // loop_header_branch
    %13 = sbr.rel (%p11) target = $region8
  $region5: #{tpu_custom_call.1} parent=0 // loop_body
    %s15 = ssub.s32 %s10, 1
    %s16 = ssub.s32 %s10, 2
    %s17 = sadd.s32 %s10, 1
    %s18 = ssub.s32 %s10, %s17
    %p19 = scmp.eq.s32.totalorder %s18, 0
    %s21 = sadd.s32 %s20, 1
    %s22 = scalar_select %p19, %s20, %s21
    %p25 = pneg %p19
    %p26 = scmp.eq.s32.totalorder %s10, 1
    %p27 = por %p25, %p26
    %p28 = scmp.ne.s32.totalorder %s20, %s23
    %p29 = scmp.eq.s32.totalorder %s10, 0
    %p30 = por %p28, %p29
    %p31 = scmp.ne.s32.totalorder %s20, %s23
    %p32 = scmp.eq.s32.totalorder %s15, 1
    %p33 = por %p31, %p32
    %p34 = scmp.ne.s32.totalorder %s23, %s24
    %p35 = scmp.eq.s32.totalorder %s15, 0
    %p36 = por %p34, %p35
    %p37 = scmp.ne.s32.totalorder %s23, %s24
    %p38 = scmp.eq.s32.totalorder %s16, 1
    %p39 = por %p37, %p38
    %p41 = scmp.ne.s32.totalorder %s24, %s40
    %p42 = scmp.eq.s32.totalorder %s16, 0
    %p43 = por %p41, %p42
    %s45 = sadd.s32 %s44, 1
    %p48 = scmp.eq.s32.totalorder %s10, 1
    %p49 = scmp.ne.s32.totalorder %s44, %s46
    %p50 = scmp.eq.s32.totalorder %s10, 0
    %p51 = por %p49, %p50
    %p52 = scmp.ne.s32.totalorder %s44, %s46
    %p53 = scmp.eq.s32.totalorder %s15, 1
    %p54 = por %p52, %p53
    %p55 = scmp.ne.s32.totalorder %s46, %s47
    %p56 = scmp.eq.s32.totalorder %s15, 0
    %p57 = por %p55, %p56
    %p58 = scmp.ne.s32.totalorder %s46, %s47
    %p59 = scmp.eq.s32.totalorder %s16, 1
    %p60 = por %p58, %p59
    %p62 = scmp.ne.s32.totalorder %s47, %s61
    %p63 = scmp.eq.s32.totalorder %s16, 0
    %p64 = por %p62, %p63
    %s66 = sadd.s32 %s65, 1
    %p69 = scmp.eq.s32.totalorder %s10, 1
    %p70 = scmp.ne.s32.totalorder %s65, %s67
    %p71 = scmp.eq.s32.totalorder %s10, 0
    %p72 = por %p70, %p71
    %p73 = scmp.ne.s32.totalorder %s65, %s67
    %p74 = scmp.eq.s32.totalorder %s15, 1
    %p75 = por %p73, %p74
    %p76 = scmp.ne.s32.totalorder %s67, %s68
    %p77 = scmp.eq.s32.totalorder %s15, 0
    %p78 = por %p76, %p77
    %p79 = scmp.ne.s32.totalorder %s67, %s68
    %p80 = scmp.eq.s32.totalorder %s16, 1
    %p81 = por %p79, %p80
    %p83 = scmp.ne.s32.totalorder %s68, %s82
    %p84 = scmp.eq.s32.totalorder %s16, 0
    %p85 = por %p83, %p84
    %s87 = sadd.s32 %s86, 1
    %p90 = scmp.eq.s32.totalorder %s10, 1
    %p91 = scmp.ne.s32.totalorder %s86, %s88
    %p92 = scmp.eq.s32.totalorder %s10, 0
    %p93 = por %p91, %p92
    %p94 = scmp.ne.s32.totalorder %s86, %s88
    %p95 = scmp.eq.s32.totalorder %s15, 1
    %p96 = por %p94, %p95
    %p97 = scmp.ne.s32.totalorder %s88, %s89
    %p98 = scmp.eq.s32.totalorder %s15, 0
    %p99 = por %p97, %p98
    %p100 = scmp.ne.s32.totalorder %s88, %s89
    %p101 = scmp.eq.s32.totalorder %s16, 1
    %p102 = por %p100, %p101
    %p104 = scmp.ne.s32.totalorder %s89, %s103
    %p105 = scmp.eq.s32.totalorder %s16, 0
    %p106 = por %p104, %p105
    %s107 = ssub.s32 %s10, %s17
    %p108 = scmp.eq.s32.totalorder %s107, 0
    %s110 = sadd.s32 %s109, 1
    %s111 = scalar_select %p108, %s109, %s110
    %p114 = pneg %p108
    %p115 = scmp.eq.s32.totalorder %s10, 1
    %p116 = por %p114, %p115
    %p117 = scmp.ne.s32.totalorder %s109, %s112
    %p118 = scmp.eq.s32.totalorder %s10, 0
    %p119 = por %p117, %p118
    %p120 = scmp.ne.s32.totalorder %s109, %s112
    %p121 = scmp.eq.s32.totalorder %s15, 1
    %p122 = por %p120, %p121
    %p123 = scmp.ne.s32.totalorder %s112, %s113
    %p124 = scmp.eq.s32.totalorder %s15, 0
    %p125 = por %p123, %p124
    %p126 = scmp.ne.s32.totalorder %s112, %s113
    %p127 = scmp.eq.s32.totalorder %s16, 1
    %p128 = por %p126, %p127
    %p130 = scmp.ne.s32.totalorder %s113, %s129
    %p131 = scmp.eq.s32.totalorder %s16, 0
    %p132 = por %p130, %p131
    %p133 = scmp.le.s32.totalorder 1, %s10
    %p134 = scmp.lt.s32.totalorder %s10, 3
    %p135 = pnand %p133, %p134
    %p136 = pneg %p135
    // Predicated region
    $region9: #{tpu_custom_call.1} parent=5 // pred_check
      _
    $region10: #{tpu_custom_call.1} parent=5 // pred_check_branch
      %138 = sbr.rel (%p135) target = $region12
    $region11: #{tpu_custom_call.1} parent=5 // pred_region
      %s139 = ssub.s32 %s10, 1
      // Predicated region
      $region13: #{tpu_custom_call.1} parent=11 // pred_check
        %p140 = pneg %p57
      $region14: #{tpu_custom_call.1} parent=11 // pred_check_branch
        %142 = sbr.rel (%p140) target = $region16
      $region15: #{tpu_custom_call.1} parent=11 // pred_region
        _
      $region16: #{tpu_custom_call.1} parent=11 // pred_fallthru
        _
      // Predicated region
      $region17: #{tpu_custom_call.1} parent=11 // pred_check
        %p143 = pneg %p78
      $region18: #{tpu_custom_call.1} parent=11 // pred_check_branch
        %145 = sbr.rel (%p143) target = $region20
      $region19: #{tpu_custom_call.1} parent=11 // pred_region
        _
      $region20: #{tpu_custom_call.1} parent=11 // pred_fallthru
        _
      // Predicated region
      $region21: #{tpu_custom_call.1} parent=11 // pred_check
        %p146 = pneg %p99
      $region22: #{tpu_custom_call.1} parent=11 // pred_check_branch
        %148 = sbr.rel (%p146) target = $region24
      $region23: #{tpu_custom_call.1} parent=11 // pred_region
        _
      $region24: #{tpu_custom_call.1} parent=11 // pred_fallthru
        _
    $region12: #{tpu_custom_call.1} parent=5 // pred_fallthru
      _
    %p149 = scmp.lt.s32.totalorder %s10, 2
    // Predicated region
    $region25: #{tpu_custom_call.1} parent=5 // pred_check
      %p150 = pneg %p149
    $region26: #{tpu_custom_call.1} parent=5 // pred_check_branch
      %152 = sbr.rel (%p150) target = $region28
    $region27: #{tpu_custom_call.1} parent=5 // pred_region
      // Predicated region
      $region29: #{tpu_custom_call.1} parent=27 // pred_check
        %p153 = pneg %p30
      $region30: #{tpu_custom_call.1} parent=27 // pred_check_branch
        %155 = sbr.rel (%p153) target = $region32
      $region31: #{tpu_custom_call.1} parent=27 // pred_region
        %p156 = scmp.lt.s32.totalorder %s10, 1
        %s157 = scalar_select %p156, %s10, 1
        %s158 = smul.addr %s157, 8
        %s159 = smul.addr %s158, 8
        %s160 = scalar_lea.vmem %s0, %s159
      $region32: #{tpu_custom_call.1} parent=27 // pred_fallthru
        _
    $region28: #{tpu_custom_call.1} parent=5 // pred_fallthru
      _
    %p161 = scmp.le.s32.totalorder 1, %s10
    %p162 = scmp.lt.s32.totalorder %s10, 3
    %p163 = pnand %p161, %p162
    %p164 = pneg %p163
    // Predicated region
    $region33: #{tpu_custom_call.1} parent=5 // pred_check
      _
    $region34: #{tpu_custom_call.1} parent=5 // pred_check_branch
      %166 = sbr.rel (%p163) target = $region36
    $region35: #{tpu_custom_call.1} parent=5 // pred_region
      %s167 = ssub.s32 %s10, 1
      %p168 = scmp.lt.s32.totalorder %s15, 1
      %s169 = scalar_select %p168, %s15, 1
      %s170 = smul.addr %s169, 8
      %s171 = smul.addr %s170, 8
      %s172 = scalar_lea.vmem %s0, %s171
      %p173 = pneg %p36
      %p174 = pneg %p33
      %p175 = pneg %p57
      %p176 = pneg %p54
      %p177 = pneg %p78
      %p178 = pneg %p75
      %p179 = pneg %p99
      %p180 = pneg %p96
      %p181 = pneg %p125
      %p182 = pneg %p122
      %p183 = scmp.lt.s32.totalorder %s15, 1
      %s184 = scalar_select %p183, %s15, 1
      %s185 = smul.addr %s184, 8
      %s186 = smul.addr %s185, 8
      %s187 = scalar_lea.vmem %s4, %s186
      %p188 = scmp.lt.s32.totalorder %s15, 1
      %s189 = scalar_select %p188, %s15, 1
      %s190 = smul.addr %s189, 8
      %s191 = smul.addr %s190, 8
      %s192 = scalar_lea.vmem %s0, %s191
      %p193 = scmp.lt.s32.totalorder %s15, 1
      %s194 = scalar_select %p193, %s15, 1
      %s195 = smul.addr %s194, 8
      %s196 = smul.addr %s195, 8
      %s197 = scalar_lea.vmem %s4, %s196
      %v199 = vld [vmem:[%s192] sm:$0xff]
      %v200 = vld [vmem:[%s192 + $0x8] sm:$0xff]
      %v201 = vld [vmem:[%s192 + $0x10] sm:$0xff]
      %v202 = vld [vmem:[%s192 + $0x18] sm:$0xff]
      %v203 = vld [vmem:[%s192 + $0x20] sm:$0xff]
      %v204 = vld [vmem:[%s192 + $0x28] sm:$0xff]
      %v205 = vld [vmem:[%s192 + $0x30] sm:$0xff]
      %v206 = vld [vmem:[%s192 + $0x38] sm:$0xff]
      %v207 = vpack.c.bf16 %v199, %v199
      %v208 = vpack.c.bf16 %v200, %v200
      %v209 = vpack.c.bf16 %v201, %v201
      %v210 = vpack.c.bf16 %v202, %v202
      %v211 = vpack.c.bf16 %v203, %v203
      %v212 = vpack.c.bf16 %v204, %v204
      %v213 = vpack.c.bf16 %v205, %v205
      %v214 = vpack.c.bf16 %v206, %v206
      %v215 = vld [vmem:[%s1] sm:$0xf]
      %v216 = vld [vmem:[%s1 + $0x4] sm:$0xf]
      %v217 = vld [vmem:[%s1 + $0x8] sm:$0xf]
      %v218 = vld [vmem:[%s1 + $0xc] sm:$0xf]
      %v219 = vld [vmem:[%s1 + $0x10] sm:$0xf]
      %v220 = vld [vmem:[%s1 + $0x14] sm:$0xf]
      %v221 = vld [vmem:[%s1 + $0x18] sm:$0xf]
      %v222 = vld [vmem:[%s1 + $0x1c] sm:$0xf]
      %v223 = vld [vmem:[%s1 + $0x20] sm:$0xf]
      %v224 = vld [vmem:[%s1 + $0x24] sm:$0xf]
      %v225 = vld [vmem:[%s1 + $0x28] sm:$0xf]
      %v226 = vld [vmem:[%s1 + $0x2c] sm:$0xf]
      %v227 = vld [vmem:[%s1 + $0x30] sm:$0xf]
      %v228 = vld [vmem:[%s1 + $0x34] sm:$0xf]
      %v229 = vld [vmem:[%s1 + $0x38] sm:$0xf]
      %v230 = vld [vmem:[%s1 + $0x3c] sm:$0xf]
      %v231 = vld [vmem:[%s1 + $0x40] sm:$0xf]
      %v232 = vld [vmem:[%s1 + $0x44] sm:$0xf]
      %v233 = vld [vmem:[%s1 + $0x48] sm:$0xf]
      %v234 = vld [vmem:[%s1 + $0x4c] sm:$0xf]
      %v235 = vld [vmem:[%s1 + $0x50] sm:$0xf]
      %v236 = vld [vmem:[%s1 + $0x54] sm:$0xf]
      %v237 = vld [vmem:[%s1 + $0x58] sm:$0xf]
      %v238 = vld [vmem:[%s1 + $0x5c] sm:$0xf]
      %v239 = vld [vmem:[%s1 + $0x60] sm:$0xf]
      %v240 = vld [vmem:[%s1 + $0x64] sm:$0xf]
      %v241 = vld [vmem:[%s1 + $0x68] sm:$0xf]
      %v242 = vld [vmem:[%s1 + $0x6c] sm:$0xf]
      %v243 = vld [vmem:[%s1 + $0x70] sm:$0xf]
      %v244 = vld [vmem:[%s1 + $0x74] sm:$0xf]
      %v245 = vld [vmem:[%s1 + $0x78] sm:$0xf]
      %v246 = vld [vmem:[%s1 + $0x7c] sm:$0xf]
      %v247 = vld [vmem:[%s1 + $0x80] sm:$0xf]
      %v248 = vld [vmem:[%s1 + $0x84] sm:$0xf]
      %v249 = vld [vmem:[%s1 + $0x88] sm:$0xf]
      %v250 = vld [vmem:[%s1 + $0x8c] sm:$0xf]
      %v251 = vld [vmem:[%s1 + $0x90] sm:$0xf]
      %v252 = vld [vmem:[%s1 + $0x94] sm:$0xf]
      %v253 = vld [vmem:[%s1 + $0x98] sm:$0xf]
      %v254 = vld [vmem:[%s1 + $0x9c] sm:$0xf]
      %v255 = vld [vmem:[%s1 + $0xa0] sm:$0xf]
      %v256 = vld [vmem:[%s1 + $0xa4] sm:$0xf]
      %v257 = vld [vmem:[%s1 + $0xa8] sm:$0xf]
      %v258 = vld [vmem:[%s1 + $0xac] sm:$0xf]
      %v259 = vld [vmem:[%s1 + $0xb0] sm:$0xf]
      %v260 = vld [vmem:[%s1 + $0xb4] sm:$0xf]
      %v261 = vld [vmem:[%s1 + $0xb8] sm:$0xf]
      %v262 = vld [vmem:[%s1 + $0xbc] sm:$0xf]
      %v271 = vunpack.c.l.b16 %v207
      %v272 = vunpack.c.l.b16 %v208
      %v273 = vunpack.c.l.b16 %v209
      %v274 = vunpack.c.l.b16 %v210
      %v275 = vunpack.c.l.b16 %v211
      %v276 = vunpack.c.l.b16 %v212
      %v277 = vunpack.c.l.b16 %v213
      %v278 = vunpack.c.l.b16 %v214
      %v279 = vpack.c.b16 %v272, %v271
      %v280 = vpack.c.b16 %v274, %v273
      %v281 = vpack.c.b16 %v276, %v275
      %v282 = vpack.c.b16 %v278, %v277
      %v287 = vunpack.c.l.b16 %v215
      %v288 = vunpack.c.l.b16 %v216
      %v289 = vunpack.c.l.b16 %v217
      %v290 = vunpack.c.l.b16 %v218
      %v291 = vpack.c.b16 %v288, %v287
      %v292 = vpack.c.b16 %v290, %v289
      %vm295 = vcmask 261120
      %v297 = vsel %vm295, %v279, 0
      %v300 = vsel %vm295, %v280, 0
      %v303 = vsel %vm295, %v281, 0
      %v306 = vsel %vm295, %v282, 0
      %308 = vmatpush.bf16.msra.mxu0 0
      %309 = vmatpush.bf16.msra.mxu0 0
      %310 = vmatpush.bf16.msra.mxu0 0
      %311 = vmatpush.bf16.msra.mxu0 0
      %312 = vmatpush.bf16.msra.mxu0 0
      %313 = vmatpush.bf16.msra.mxu0 0
      %314 = vmatpush.bf16.msra.mxu0 %v292
      %315 = vmatpush.bf16.msra.mxu0 %v291
      %316 = vmatmul.bf16.gmra.mxu0 %v297
      %v317 = vpop.f32.mrf.mxu0
      %v318 = vadd.f32 0.0, %v317
      %v319 = vpop.f32.mrf.mxu0
      %v320 = vadd.f32 0.0, %v319
      %321 = vmatmul.bf16.gmra.mxu0 %v300
      %v322 = vpop.f32.mrf.mxu0
      %v323 = vadd.f32 0.0, %v322
      %v324 = vpop.f32.mrf.mxu0
      %v325 = vadd.f32 0.0, %v324
      %326 = vmatmul.bf16.gmra.mxu0 %v303
      %v327 = vpop.f32.mrf.mxu0
      %v328 = vadd.f32 0.0, %v327
      %v329 = vpop.f32.mrf.mxu0
      %v330 = vadd.f32 0.0, %v329
      %331 = vmatmul.bf16.gmra.mxu0 %v306
      %v332 = vpop.f32.mrf.mxu0
      %v333 = vadd.f32 0.0, %v332
      %v334 = vpop.f32.mrf.mxu0
      %v335 = vadd.f32 0.0, %v334
      %336 = vdwg.mxu0
      %v341 = vunpack.c.l.b16 %v219
      %v342 = vunpack.c.l.b16 %v220
      %v343 = vunpack.c.l.b16 %v221
      %v344 = vunpack.c.l.b16 %v222
      %v345 = vpack.c.b16 %v342, %v341
      %v346 = vpack.c.b16 %v344, %v343
      %349 = vmatpush.bf16.msra.mxu0 0
      %350 = vmatpush.bf16.msra.mxu0 0
      %351 = vmatpush.bf16.msra.mxu0 0
      %352 = vmatpush.bf16.msra.mxu0 0
      %353 = vmatpush.bf16.msra.mxu0 0
      %354 = vmatpush.bf16.msra.mxu0 0
      %355 = vmatpush.bf16.msra.mxu0 %v346
      %356 = vmatpush.bf16.msra.mxu0 %v345
      %357 = vmatmul.bf16.gmra.mxu0 %v297
      %v358 = vpop.f32.mrf.mxu0
      %v359 = vadd.f32 0.0, %v358
      %v360 = vpop.f32.mrf.mxu0
      %v361 = vadd.f32 0.0, %v360
      %362 = vmatmul.bf16.gmra.mxu0 %v300
      %v363 = vpop.f32.mrf.mxu0
      %v364 = vadd.f32 0.0, %v363
      %v365 = vpop.f32.mrf.mxu0
      %v366 = vadd.f32 0.0, %v365
      %367 = vmatmul.bf16.gmra.mxu0 %v303
      %v368 = vpop.f32.mrf.mxu0
      %v369 = vadd.f32 0.0, %v368
      %v370 = vpop.f32.mrf.mxu0
      %v371 = vadd.f32 0.0, %v370
      %372 = vmatmul.bf16.gmra.mxu0 %v306
      %v373 = vpop.f32.mrf.mxu0
      %v374 = vadd.f32 0.0, %v373
      %v375 = vpop.f32.mrf.mxu0
      %v376 = vadd.f32 0.0, %v375
      %377 = vdwg.mxu0
      %v382 = vunpack.c.l.b16 %v223
      %v383 = vunpack.c.l.b16 %v224
      %v384 = vunpack.c.l.b16 %v225
      %v385 = vunpack.c.l.b16 %v226
      %v386 = vpack.c.b16 %v383, %v382
      %v387 = vpack.c.b16 %v385, %v384
      %390 = vmatpush.bf16.msra.mxu0 0
      %391 = vmatpush.bf16.msra.mxu0 0
      %392 = vmatpush.bf16.msra.mxu0 0
      %393 = vmatpush.bf16.msra.mxu0 0
      %394 = vmatpush.bf16.msra.mxu0 0
      %395 = vmatpush.bf16.msra.mxu0 0
      %396 = vmatpush.bf16.msra.mxu0 %v387
      %397 = vmatpush.bf16.msra.mxu0 %v386
      %398 = vmatmul.bf16.gmra.mxu0 %v297
      %v399 = vpop.f32.mrf.mxu0
      %v400 = vadd.f32 0.0, %v399
      %v401 = vpop.f32.mrf.mxu0
      %v402 = vadd.f32 0.0, %v401
      %403 = vmatmul.bf16.gmra.mxu0 %v300
      %v404 = vpop.f32.mrf.mxu0
      %v405 = vadd.f32 0.0, %v404
      %v406 = vpop.f32.mrf.mxu0
      %v407 = vadd.f32 0.0, %v406
      %408 = vmatmul.bf16.gmra.mxu0 %v303
      %v409 = vpop.f32.mrf.mxu0
      %v410 = vadd.f32 0.0, %v409
      %v411 = vpop.f32.mrf.mxu0
      %v412 = vadd.f32 0.0, %v411
      %413 = vmatmul.bf16.gmra.mxu0 %v306
      %v414 = vpop.f32.mrf.mxu0
      %v415 = vadd.f32 0.0, %v414
      %v416 = vpop.f32.mrf.mxu0
      %v417 = vadd.f32 0.0, %v416
      %418 = vdwg.mxu0
      %v423 = vunpack.c.l.b16 %v227
      %v424 = vunpack.c.l.b16 %v228
      %v425 = vunpack.c.l.b16 %v229
      %v426 = vunpack.c.l.b16 %v230
      %v427 = vpack.c.b16 %v424, %v423
      %v428 = vpack.c.b16 %v426, %v425
      %431 = vmatpush.bf16.msra.mxu0 0
      %432 = vmatpush.bf16.msra.mxu0 0
      %433 = vmatpush.bf16.msra.mxu0 0
      %434 = vmatpush.bf16.msra.mxu0 0
      %435 = vmatpush.bf16.msra.mxu0 0
      %436 = vmatpush.bf16.msra.mxu0 0
      %437 = vmatpush.bf16.msra.mxu0 %v428
      %438 = vmatpush.bf16.msra.mxu0 %v427
      %439 = vmatmul.bf16.gmra.mxu0 %v297
      %v440 = vpop.f32.mrf.mxu0
      %v441 = vadd.f32 0.0, %v440
      %v442 = vpop.f32.mrf.mxu0
      %v443 = vadd.f32 0.0, %v442
      %444 = vmatmul.bf16.gmra.mxu0 %v300
      %v445 = vpop.f32.mrf.mxu0
      %v446 = vadd.f32 0.0, %v445
      %v447 = vpop.f32.mrf.mxu0
      %v448 = vadd.f32 0.0, %v447
      %449 = vmatmul.bf16.gmra.mxu0 %v303
      %v450 = vpop.f32.mrf.mxu0
      %v451 = vadd.f32 0.0, %v450
      %v452 = vpop.f32.mrf.mxu0
      %v453 = vadd.f32 0.0, %v452
      %454 = vmatmul.bf16.gmra.mxu0 %v306
      %v455 = vpop.f32.mrf.mxu0
      %v456 = vadd.f32 0.0, %v455
      %v457 = vpop.f32.mrf.mxu0
      %v458 = vadd.f32 0.0, %v457
      %459 = vdwg.mxu0
      %v464 = vunpack.c.l.b16 %v231
      %v465 = vunpack.c.l.b16 %v232
      %v466 = vunpack.c.l.b16 %v233
      %v467 = vunpack.c.l.b16 %v234
      %v468 = vpack.c.b16 %v465, %v464
      %v469 = vpack.c.b16 %v467, %v466
      %472 = vmatpush.bf16.msra.mxu0 0
      %473 = vmatpush.bf16.msra.mxu0 0
      %474 = vmatpush.bf16.msra.mxu0 0
      %475 = vmatpush.bf16.msra.mxu0 0
      %476 = vmatpush.bf16.msra.mxu0 0
      %477 = vmatpush.bf16.msra.mxu0 0
      %478 = vmatpush.bf16.msra.mxu0 %v469
      %479 = vmatpush.bf16.msra.mxu0 %v468
      %480 = vmatmul.bf16.gmra.mxu0 %v297
      %v481 = vpop.f32.mrf.mxu0
      %v482 = vadd.f32 0.0, %v481
      %v483 = vpop.f32.mrf.mxu0
      %v484 = vadd.f32 0.0, %v483
      %485 = vmatmul.bf16.gmra.mxu0 %v300
      %v486 = vpop.f32.mrf.mxu0
      %v487 = vadd.f32 0.0, %v486
      %v488 = vpop.f32.mrf.mxu0
      %v489 = vadd.f32 0.0, %v488
      %490 = vmatmul.bf16.gmra.mxu0 %v303
      %v491 = vpop.f32.mrf.mxu0
      %v492 = vadd.f32 0.0, %v491
      %v493 = vpop.f32.mrf.mxu0
      %v494 = vadd.f32 0.0, %v493
      %495 = vmatmul.bf16.gmra.mxu0 %v306
      %v496 = vpop.f32.mrf.mxu0
      %v497 = vadd.f32 0.0, %v496
      %v498 = vpop.f32.mrf.mxu0
      %v499 = vadd.f32 0.0, %v498
      %500 = vdwg.mxu0
      %v505 = vunpack.c.l.b16 %v235
      %v506 = vunpack.c.l.b16 %v236
      %v507 = vunpack.c.l.b16 %v237
      %v508 = vunpack.c.l.b16 %v238
      %v509 = vpack.c.b16 %v506, %v505
      %v510 = vpack.c.b16 %v508, %v507
      %513 = vmatpush.bf16.msra.mxu0 0
      %514 = vmatpush.bf16.msra.mxu0 0
      %515 = vmatpush.bf16.msra.mxu0 0
      %516 = vmatpush.bf16.msra.mxu0 0
      %517 = vmatpush.bf16.msra.mxu0 0
      %518 = vmatpush.bf16.msra.mxu0 0
      %519 = vmatpush.bf16.msra.mxu0 %v510
      %520 = vmatpush.bf16.msra.mxu0 %v509
      %521 = vmatmul.bf16.gmra.mxu0 %v297
      %v522 = vpop.f32.mrf.mxu0
      %v523 = vadd.f32 0.0, %v522
      %v524 = vpop.f32.mrf.mxu0
      %v525 = vadd.f32 0.0, %v524
      %526 = vmatmul.bf16.gmra.mxu0 %v300
      %v527 = vpop.f32.mrf.mxu0
      %v528 = vadd.f32 0.0, %v527
      %v529 = vpop.f32.mrf.mxu0
      %v530 = vadd.f32 0.0, %v529
      %531 = vmatmul.bf16.gmra.mxu0 %v303
      %v532 = vpop.f32.mrf.mxu0
      %v533 = vadd.f32 0.0, %v532
      %v534 = vpop.f32.mrf.mxu0
      %v535 = vadd.f32 0.0, %v534
      %536 = vmatmul.bf16.gmra.mxu0 %v306
      %v537 = vpop.f32.mrf.mxu0
      %v538 = vadd.f32 0.0, %v537
      %v539 = vpop.f32.mrf.mxu0
      %v540 = vadd.f32 0.0, %v539
      %541 = vdwg.mxu0
      %v546 = vunpack.c.l.b16 %v239
      %v547 = vunpack.c.l.b16 %v240
      %v548 = vunpack.c.l.b16 %v241
      %v549 = vunpack.c.l.b16 %v242
      %v550 = vpack.c.b16 %v547, %v546
      %v551 = vpack.c.b16 %v549, %v548
      %554 = vmatpush.bf16.msra.mxu0 0
      %555 = vmatpush.bf16.msra.mxu0 0
      %556 = vmatpush.bf16.msra.mxu0 0
      %557 = vmatpush.bf16.msra.mxu0 0
      %558 = vmatpush.bf16.msra.mxu0 0
      %559 = vmatpush.bf16.msra.mxu0 0
      %560 = vmatpush.bf16.msra.mxu0 %v551
      %561 = vmatpush.bf16.msra.mxu0 %v550
      %562 = vmatmul.bf16.gmra.mxu0 %v297
      %v563 = vpop.f32.mrf.mxu0
      %v564 = vadd.f32 0.0, %v563
      %v565 = vpop.f32.mrf.mxu0
      %v566 = vadd.f32 0.0, %v565
      %567 = vmatmul.bf16.gmra.mxu0 %v300
      %v568 = vpop.f32.mrf.mxu0
      %v569 = vadd.f32 0.0, %v568
      %v570 = vpop.f32.mrf.mxu0
      %v571 = vadd.f32 0.0, %v570
      %572 = vmatmul.bf16.gmra.mxu0 %v303
      %v573 = vpop.f32.mrf.mxu0
      %v574 = vadd.f32 0.0, %v573
      %v575 = vpop.f32.mrf.mxu0
      %v576 = vadd.f32 0.0, %v575
      %577 = vmatmul.bf16.gmra.mxu0 %v306
      %v578 = vpop.f32.mrf.mxu0
      %v579 = vadd.f32 0.0, %v578
      %v580 = vpop.f32.mrf.mxu0
      %v581 = vadd.f32 0.0, %v580
      %582 = vdwg.mxu0
      %v587 = vunpack.c.l.b16 %v243
      %v588 = vunpack.c.l.b16 %v244
      %v589 = vunpack.c.l.b16 %v245
      %v590 = vunpack.c.l.b16 %v246
      %v591 = vpack.c.b16 %v588, %v587
      %v592 = vpack.c.b16 %v590, %v589
      %595 = vmatpush.bf16.msra.mxu0 0
      %596 = vmatpush.bf16.msra.mxu0 0
      %597 = vmatpush.bf16.msra.mxu0 0
      %598 = vmatpush.bf16.msra.mxu0 0
      %599 = vmatpush.bf16.msra.mxu0 0
      %600 = vmatpush.bf16.msra.mxu0 0
      %601 = vmatpush.bf16.msra.mxu0 %v592
      %602 = vmatpush.bf16.msra.mxu0 %v591
      %603 = vmatmul.bf16.gmra.mxu0 %v297
      %v604 = vpop.f32.mrf.mxu0
      %v605 = vadd.f32 0.0, %v604
      %v606 = vpop.f32.mrf.mxu0
      %v607 = vadd.f32 0.0, %v606
      %608 = vmatmul.bf16.gmra.mxu0 %v300
      %v609 = vpop.f32.mrf.mxu0
      %v610 = vadd.f32 0.0, %v609
      %v611 = vpop.f32.mrf.mxu0
      %v612 = vadd.f32 0.0, %v611
      %613 = vmatmul.bf16.gmra.mxu0 %v303
      %v614 = vpop.f32.mrf.mxu0
      %v615 = vadd.f32 0.0, %v614
      %v616 = vpop.f32.mrf.mxu0
      %v617 = vadd.f32 0.0, %v616
      %618 = vmatmul.bf16.gmra.mxu0 %v306
      %v619 = vpop.f32.mrf.mxu0
      %v620 = vadd.f32 0.0, %v619
      %v621 = vpop.f32.mrf.mxu0
      %v622 = vadd.f32 0.0, %v621
      %623 = vdwg.mxu0
      %v628 = vunpack.c.l.b16 %v247
      %v629 = vunpack.c.l.b16 %v248
      %v630 = vunpack.c.l.b16 %v249
      %v631 = vunpack.c.l.b16 %v250
      %v632 = vpack.c.b16 %v629, %v628
      %v633 = vpack.c.b16 %v631, %v630
      %636 = vmatpush.bf16.msra.mxu0 0
      %637 = vmatpush.bf16.msra.mxu0 0
      %638 = vmatpush.bf16.msra.mxu0 0
      %639 = vmatpush.bf16.msra.mxu0 0
      %640 = vmatpush.bf16.msra.mxu0 0
      %641 = vmatpush.bf16.msra.mxu0 0
      %642 = vmatpush.bf16.msra.mxu0 %v633
      %643 = vmatpush.bf16.msra.mxu0 %v632
      %644 = vmatmul.bf16.gmra.mxu0 %v297
      %v645 = vpop.f32.mrf.mxu0
      %v646 = vadd.f32 0.0, %v645
      %v647 = vpop.f32.mrf.mxu0
      %v648 = vadd.f32 0.0, %v647
      %649 = vmatmul.bf16.gmra.mxu0 %v300
      %v650 = vpop.f32.mrf.mxu0
      %v651 = vadd.f32 0.0, %v650
      %v652 = vpop.f32.mrf.mxu0
      %v653 = vadd.f32 0.0, %v652
      %654 = vmatmul.bf16.gmra.mxu0 %v303
      %v655 = vpop.f32.mrf.mxu0
      %v656 = vadd.f32 0.0, %v655
      %v657 = vpop.f32.mrf.mxu0
      %v658 = vadd.f32 0.0, %v657
      %659 = vmatmul.bf16.gmra.mxu0 %v306
      %v660 = vpop.f32.mrf.mxu0
      %v661 = vadd.f32 0.0, %v660
      %v662 = vpop.f32.mrf.mxu0
      %v663 = vadd.f32 0.0, %v662
      %664 = vdwg.mxu0
      %v669 = vunpack.c.l.b16 %v251
      %v670 = vunpack.c.l.b16 %v252
      %v671 = vunpack.c.l.b16 %v253
      %v672 = vunpack.c.l.b16 %v254
      %v673 = vpack.c.b16 %v670, %v669
      %v674 = vpack.c.b16 %v672, %v671
      %677 = vmatpush.bf16.msra.mxu0 0
      %678 = vmatpush.bf16.msra.mxu0 0
      %679 = vmatpush.bf16.msra.mxu0 0
      %680 = vmatpush.bf16.msra.mxu0 0
      %681 = vmatpush.bf16.msra.mxu0 0
      %682 = vmatpush.bf16.msra.mxu0 0
      %683 = vmatpush.bf16.msra.mxu0 %v674
      %684 = vmatpush.bf16.msra.mxu0 %v673
      %685 = vmatmul.bf16.gmra.mxu0 %v297
      %v686 = vpop.f32.mrf.mxu0
      %v687 = vadd.f32 0.0, %v686
      %v688 = vpop.f32.mrf.mxu0
      %v689 = vadd.f32 0.0, %v688
      %690 = vmatmul.bf16.gmra.mxu0 %v300
      %v691 = vpop.f32.mrf.mxu0
      %v692 = vadd.f32 0.0, %v691
      %v693 = vpop.f32.mrf.mxu0
      %v694 = vadd.f32 0.0, %v693
      %695 = vmatmul.bf16.gmra.mxu0 %v303
      %v696 = vpop.f32.mrf.mxu0
      %v697 = vadd.f32 0.0, %v696
      %v698 = vpop.f32.mrf.mxu0
      %v699 = vadd.f32 0.0, %v698
      %700 = vmatmul.bf16.gmra.mxu0 %v306
      %v701 = vpop.f32.mrf.mxu0
      %v702 = vadd.f32 0.0, %v701
      %v703 = vpop.f32.mrf.mxu0
      %v704 = vadd.f32 0.0, %v703
      %705 = vdwg.mxu0
      %v710 = vunpack.c.l.b16 %v255
      %v711 = vunpack.c.l.b16 %v256
      %v712 = vunpack.c.l.b16 %v257
      %v713 = vunpack.c.l.b16 %v258
      %v714 = vpack.c.b16 %v711, %v710
      %v715 = vpack.c.b16 %v713, %v712
      %718 = vmatpush.bf16.msra.mxu0 0
      %719 = vmatpush.bf16.msra.mxu0 0
      %720 = vmatpush.bf16.msra.mxu0 0
      %721 = vmatpush.bf16.msra.mxu0 0
      %722 = vmatpush.bf16.msra.mxu0 0
      %723 = vmatpush.bf16.msra.mxu0 0
      %724 = vmatpush.bf16.msra.mxu0 %v715
      %725 = vmatpush.bf16.msra.mxu0 %v714
      %726 = vmatmul.bf16.gmra.mxu0 %v297
      %v727 = vpop.f32.mrf.mxu0
      %v728 = vadd.f32 0.0, %v727
      %v729 = vpop.f32.mrf.mxu0
      %v730 = vadd.f32 0.0, %v729
      %731 = vmatmul.bf16.gmra.mxu0 %v300
      %v732 = vpop.f32.mrf.mxu0
      %v733 = vadd.f32 0.0, %v732
      %v734 = vpop.f32.mrf.mxu0
      %v735 = vadd.f32 0.0, %v734
      %736 = vmatmul.bf16.gmra.mxu0 %v303
      %v737 = vpop.f32.mrf.mxu0
      %v738 = vadd.f32 0.0, %v737
      %v739 = vpop.f32.mrf.mxu0
      %v740 = vadd.f32 0.0, %v739
      %741 = vmatmul.bf16.gmra.mxu0 %v306
      %v742 = vpop.f32.mrf.mxu0
      %v743 = vadd.f32 0.0, %v742
      %v744 = vpop.f32.mrf.mxu0
      %v745 = vadd.f32 0.0, %v744
      %746 = vdwg.mxu0
      %v751 = vunpack.c.l.b16 %v259
      %v752 = vunpack.c.l.b16 %v260
      %v753 = vunpack.c.l.b16 %v261
      %v754 = vunpack.c.l.b16 %v262
      %v755 = vpack.c.b16 %v752, %v751
      %v756 = vpack.c.b16 %v754, %v753
      %759 = vmatpush.bf16.msra.mxu0 0
      %760 = vmatpush.bf16.msra.mxu0 0
      %761 = vmatpush.bf16.msra.mxu0 0
      %762 = vmatpush.bf16.msra.mxu0 0
      %763 = vmatpush.bf16.msra.mxu0 0
      %764 = vmatpush.bf16.msra.mxu0 0
      %765 = vmatpush.bf16.msra.mxu0 %v756
      %766 = vmatpush.bf16.msra.mxu0 %v755
      %767 = vmatmul.bf16.gmra.mxu0 %v297
      %v768 = vpop.f32.mrf.mxu0
      %v769 = vadd.f32 0.0, %v768
      %v770 = vpop.f32.mrf.mxu0
      %v771 = vadd.f32 0.0, %v770
      %772 = vmatmul.bf16.gmra.mxu0 %v300
      %v773 = vpop.f32.mrf.mxu0
      %v774 = vadd.f32 0.0, %v773
      %v775 = vpop.f32.mrf.mxu0
      %v776 = vadd.f32 0.0, %v775
      %777 = vmatmul.bf16.gmra.mxu0 %v303
      %v778 = vpop.f32.mrf.mxu0
      %v779 = vadd.f32 0.0, %v778
      %v780 = vpop.f32.mrf.mxu0
      %v781 = vadd.f32 0.0, %v780
      %782 = vmatmul.bf16.gmra.mxu0 %v306
      %v783 = vpop.f32.mrf.mxu0
      %v784 = vadd.f32 0.0, %v783
      %v785 = vpop.f32.mrf.mxu0
      %v786 = vadd.f32 0.0, %v785
      %787 = vdwg.mxu0
      %v788 = vpack.c.bf16 %v318, %v318
      %v789 = vpack.c.bf16 %v320, %v320
      %v790 = vpack.c.bf16 %v323, %v323
      %v791 = vpack.c.bf16 %v325, %v325
      %v792 = vpack.c.bf16 %v328, %v328
      %v793 = vpack.c.bf16 %v330, %v330
      %v794 = vpack.c.bf16 %v333, %v333
      %v795 = vpack.c.bf16 %v335, %v335
      %v796 = vpack.c.bf16 %v359, %v359
      %v797 = vpack.c.bf16 %v361, %v361
      %v798 = vpack.c.bf16 %v364, %v364
      %v799 = vpack.c.bf16 %v366, %v366
      %v800 = vpack.c.bf16 %v369, %v369
      %v801 = vpack.c.bf16 %v371, %v371
      %v802 = vpack.c.bf16 %v374, %v374
      %v803 = vpack.c.bf16 %v376, %v376
      %v804 = vpack.c.bf16 %v400, %v400
      %v805 = vpack.c.bf16 %v402, %v402
      %v806 = vpack.c.bf16 %v405, %v405
      %v807 = vpack.c.bf16 %v407, %v407
      %v808 = vpack.c.bf16 %v410, %v410
      %v809 = vpack.c.bf16 %v412, %v412
      %v810 = vpack.c.bf16 %v415, %v415
      %v811 = vpack.c.bf16 %v417, %v417
      %v812 = vpack.c.bf16 %v441, %v441
      %v813 = vpack.c.bf16 %v443, %v443
      %v814 = vpack.c.bf16 %v446, %v446
      %v815 = vpack.c.bf16 %v448, %v448
      %v816 = vpack.c.bf16 %v451, %v451
      %v817 = vpack.c.bf16 %v453, %v453
      %v818 = vpack.c.bf16 %v456, %v456
      %v819 = vpack.c.bf16 %v458, %v458
      %v820 = vpack.c.bf16 %v482, %v482
      %v821 = vpack.c.bf16 %v484, %v484
      %v822 = vpack.c.bf16 %v487, %v487
      %v823 = vpack.c.bf16 %v489, %v489
      %v824 = vpack.c.bf16 %v492, %v492
      %v825 = vpack.c.bf16 %v494, %v494
      %v826 = vpack.c.bf16 %v497, %v497
      %v827 = vpack.c.bf16 %v499, %v499
      %v828 = vpack.c.bf16 %v523, %v523
      %v829 = vpack.c.bf16 %v525, %v525
      %v830 = vpack.c.bf16 %v528, %v528
      %v831 = vpack.c.bf16 %v530, %v530
      %v832 = vpack.c.bf16 %v533, %v533
      %v833 = vpack.c.bf16 %v535, %v535
      %v834 = vpack.c.bf16 %v538, %v538
      %v835 = vpack.c.bf16 %v540, %v540
      %v836 = vpack.c.bf16 %v564, %v564
      %v837 = vpack.c.bf16 %v566, %v566
      %v838 = vpack.c.bf16 %v569, %v569
      %v839 = vpack.c.bf16 %v571, %v571
      %v840 = vpack.c.bf16 %v574, %v574
      %v841 = vpack.c.bf16 %v576, %v576
      %v842 = vpack.c.bf16 %v579, %v579
      %v843 = vpack.c.bf16 %v581, %v581
      %v844 = vpack.c.bf16 %v605, %v605
      %v845 = vpack.c.bf16 %v607, %v607
      %v846 = vpack.c.bf16 %v610, %v610
      %v847 = vpack.c.bf16 %v612, %v612
      %v848 = vpack.c.bf16 %v615, %v615
      %v849 = vpack.c.bf16 %v617, %v617
      %v850 = vpack.c.bf16 %v620, %v620
      %v851 = vpack.c.bf16 %v622, %v622
      %v860 = vunpack.c.l.b16 %v788
      %v861 = vunpack.c.l.b16 %v789
      %v862 = vunpack.c.l.b16 %v790
      %v863 = vunpack.c.l.b16 %v791
      %v864 = vunpack.c.l.b16 %v792
      %v865 = vunpack.c.l.b16 %v793
      %v866 = vunpack.c.l.b16 %v794
      %v867 = vunpack.c.l.b16 %v795
      %v868 = vpack.c.b16 %v861, %v860
      %v869 = vpack.c.b16 %v863, %v862
      %v870 = vpack.c.b16 %v865, %v864
      %v871 = vpack.c.b16 %v867, %v866
      %v880 = vunpack.c.l.b16 %v820
      %v881 = vunpack.c.l.b16 %v821
      %v882 = vunpack.c.l.b16 %v822
      %v883 = vunpack.c.l.b16 %v823
      %v884 = vunpack.c.l.b16 %v824
      %v885 = vunpack.c.l.b16 %v825
      %v886 = vunpack.c.l.b16 %v826
      %v887 = vunpack.c.l.b16 %v827
      %v888 = vpack.c.b16 %v881, %v880
      %v889 = vpack.c.b16 %v883, %v882
      %v890 = vpack.c.b16 %v885, %v884
      %v891 = vpack.c.b16 %v887, %v886
      %vm892 = vcmask 64512
      %v894 = vsel %vm892, %v868, 0
      %v897 = vsel %vm892, %v869, 0
      %v900 = vsel %vm892, %v870, 0
      %v903 = vsel %vm892, %v871, 0
      %v906 = vsel %vm892, %v888, 0
      %v909 = vsel %vm892, %v889, 0
      %v912 = vsel %vm892, %v890, 0
      %v915 = vsel %vm892, %v891, 0
      %917 = vmatpush.bf16.xpose.msra.mxu0 0
      %918 = vmatpush.bf16.xpose.msra.mxu0 0
      %919 = vmatpush.bf16.xpose.msra.mxu0 0
      %920 = vmatpush.bf16.xpose.msra.mxu0 0
      %921 = vmatpush.bf16.xpose.msra.mxu0 %v915
      %922 = vmatpush.bf16.xpose.msra.mxu0 %v912
      %923 = vmatpush.bf16.xpose.msra.mxu0 %v909
      %924 = vmatpush.bf16.xpose.msra.mxu0 %v906
      %925 = vmatmul.bf16.gmra.mxu0 %v894
      %v926 = vpop.f32.mrf.mxu0
      %v927 = vadd.f32 0.0, %v926
      %v928 = vpop.f32.mrf.mxu0
      %v929 = vadd.f32 0.0, %v928
      %930 = vmatmul.bf16.gmra.mxu0 %v897
      %v931 = vpop.f32.mrf.mxu0
      %v932 = vadd.f32 0.0, %v931
      %v933 = vpop.f32.mrf.mxu0
      %v934 = vadd.f32 0.0, %v933
      %935 = vmatmul.bf16.gmra.mxu0 %v900
      %v936 = vpop.f32.mrf.mxu0
      %v937 = vadd.f32 0.0, %v936
      %v938 = vpop.f32.mrf.mxu0
      %v939 = vadd.f32 0.0, %v938
      %940 = vmatmul.bf16.gmra.mxu0 %v903
      %v941 = vpop.f32.mrf.mxu0
      %v942 = vadd.f32 0.0, %v941
      %v943 = vpop.f32.mrf.mxu0
      %v944 = vadd.f32 0.0, %v943
      %945 = vdwg.mxu0
      %v954 = vunpack.c.l.b16 %v796
      %v955 = vunpack.c.l.b16 %v797
      %v956 = vunpack.c.l.b16 %v798
      %v957 = vunpack.c.l.b16 %v799
      %v958 = vunpack.c.l.b16 %v800
      %v959 = vunpack.c.l.b16 %v801
      %v960 = vunpack.c.l.b16 %v802
      %v961 = vunpack.c.l.b16 %v803
      %v962 = vpack.c.b16 %v955, %v954
      %v963 = vpack.c.b16 %v957, %v956
      %v964 = vpack.c.b16 %v959, %v958
      %v965 = vpack.c.b16 %v961, %v960
      %v974 = vunpack.c.l.b16 %v828
      %v975 = vunpack.c.l.b16 %v829
      %v976 = vunpack.c.l.b16 %v830
      %v977 = vunpack.c.l.b16 %v831
      %v978 = vunpack.c.l.b16 %v832
      %v979 = vunpack.c.l.b16 %v833
      %v980 = vunpack.c.l.b16 %v834
      %v981 = vunpack.c.l.b16 %v835
      %v982 = vpack.c.b16 %v975, %v974
      %v983 = vpack.c.b16 %v977, %v976
      %v984 = vpack.c.b16 %v979, %v978
      %v985 = vpack.c.b16 %v981, %v980
      %v987 = vsel %vm892, %v962, 0
      %v990 = vsel %vm892, %v963, 0
      %v993 = vsel %vm892, %v964, 0
      %v996 = vsel %vm892, %v965, 0
      %v999 = vsel %vm892, %v982, 0
      %v1002 = vsel %vm892, %v983, 0
      %v1005 = vsel %vm892, %v984, 0
      %v1008 = vsel %vm892, %v985, 0
      %1010 = vmatpush.bf16.xpose.msra.mxu0 0
      %1011 = vmatpush.bf16.xpose.msra.mxu0 0
      %1012 = vmatpush.bf16.xpose.msra.mxu0 0
      %1013 = vmatpush.bf16.xpose.msra.mxu0 0
      %1014 = vmatpush.bf16.xpose.msra.mxu0 %v1008
      %1015 = vmatpush.bf16.xpose.msra.mxu0 %v1005
      %1016 = vmatpush.bf16.xpose.msra.mxu0 %v1002
      %1017 = vmatpush.bf16.xpose.msra.mxu0 %v999
      %1018 = vmatmul.bf16.gmra.mxu0 %v987
      %v1019 = vpop.f32.mrf.mxu0
      %v1020 = vadd.f32 0.0, %v1019
      %v1021 = vpop.f32.mrf.mxu0
      %v1022 = vadd.f32 0.0, %v1021
      %1023 = vmatmul.bf16.gmra.mxu0 %v990
      %v1024 = vpop.f32.mrf.mxu0
      %v1025 = vadd.f32 0.0, %v1024
      %v1026 = vpop.f32.mrf.mxu0
      %v1027 = vadd.f32 0.0, %v1026
      %1028 = vmatmul.bf16.gmra.mxu0 %v993
      %v1029 = vpop.f32.mrf.mxu0
      %v1030 = vadd.f32 0.0, %v1029
      %v1031 = vpop.f32.mrf.mxu0
      %v1032 = vadd.f32 0.0, %v1031
      %1033 = vmatmul.bf16.gmra.mxu0 %v996
      %v1034 = vpop.f32.mrf.mxu0
      %v1035 = vadd.f32 0.0, %v1034
      %v1036 = vpop.f32.mrf.mxu0
      %v1037 = vadd.f32 0.0, %v1036
      %1038 = vdwg.mxu0
      %v1047 = vunpack.c.l.b16 %v804
      %v1048 = vunpack.c.l.b16 %v805
      %v1049 = vunpack.c.l.b16 %v806
      %v1050 = vunpack.c.l.b16 %v807
      %v1051 = vunpack.c.l.b16 %v808
      %v1052 = vunpack.c.l.b16 %v809
      %v1053 = vunpack.c.l.b16 %v810
      %v1054 = vunpack.c.l.b16 %v811
      %v1055 = vpack.c.b16 %v1048, %v1047
      %v1056 = vpack.c.b16 %v1050, %v1049
      %v1057 = vpack.c.b16 %v1052, %v1051
      %v1058 = vpack.c.b16 %v1054, %v1053
      %v1067 = vunpack.c.l.b16 %v836
      %v1068 = vunpack.c.l.b16 %v837
      %v1069 = vunpack.c.l.b16 %v838
      %v1070 = vunpack.c.l.b16 %v839
      %v1071 = vunpack.c.l.b16 %v840
      %v1072 = vunpack.c.l.b16 %v841
      %v1073 = vunpack.c.l.b16 %v842
      %v1074 = vunpack.c.l.b16 %v843
      %v1075 = vpack.c.b16 %v1068, %v1067
      %v1076 = vpack.c.b16 %v1070, %v1069
      %v1077 = vpack.c.b16 %v1072, %v1071
      %v1078 = vpack.c.b16 %v1074, %v1073
      %v1080 = vsel %vm892, %v1055, 0
      %v1083 = vsel %vm892, %v1056, 0
      %v1086 = vsel %vm892, %v1057, 0
      %v1089 = vsel %vm892, %v1058, 0
      %v1092 = vsel %vm892, %v1075, 0
      %v1095 = vsel %vm892, %v1076, 0
      %v1098 = vsel %vm892, %v1077, 0
      %v1101 = vsel %vm892, %v1078, 0
      %1103 = vmatpush.bf16.xpose.msra.mxu0 0
      %1104 = vmatpush.bf16.xpose.msra.mxu0 0
      %1105 = vmatpush.bf16.xpose.msra.mxu0 0
      %1106 = vmatpush.bf16.xpose.msra.mxu0 0
      %1107 = vmatpush.bf16.xpose.msra.mxu0 %v1101
      %1108 = vmatpush.bf16.xpose.msra.mxu0 %v1098
      %1109 = vmatpush.bf16.xpose.msra.mxu0 %v1095
      %1110 = vmatpush.bf16.xpose.msra.mxu0 %v1092
      %1111 = vmatmul.bf16.gmra.mxu0 %v1080
      %v1112 = vpop.f32.mrf.mxu0
      %v1113 = vadd.f32 0.0, %v1112
      %v1114 = vpop.f32.mrf.mxu0
      %v1115 = vadd.f32 0.0, %v1114
      %1116 = vmatmul.bf16.gmra.mxu0 %v1083
      %v1117 = vpop.f32.mrf.mxu0
      %v1118 = vadd.f32 0.0, %v1117
      %v1119 = vpop.f32.mrf.mxu0
      %v1120 = vadd.f32 0.0, %v1119
      %1121 = vmatmul.bf16.gmra.mxu0 %v1086
      %v1122 = vpop.f32.mrf.mxu0
      %v1123 = vadd.f32 0.0, %v1122
      %v1124 = vpop.f32.mrf.mxu0
      %v1125 = vadd.f32 0.0, %v1124
      %1126 = vmatmul.bf16.gmra.mxu0 %v1089
      %v1127 = vpop.f32.mrf.mxu0
      %v1128 = vadd.f32 0.0, %v1127
      %v1129 = vpop.f32.mrf.mxu0
      %v1130 = vadd.f32 0.0, %v1129
      %1131 = vdwg.mxu0
      %v1140 = vunpack.c.l.b16 %v812
      %v1141 = vunpack.c.l.b16 %v813
      %v1142 = vunpack.c.l.b16 %v814
      %v1143 = vunpack.c.l.b16 %v815
      %v1144 = vunpack.c.l.b16 %v816
      %v1145 = vunpack.c.l.b16 %v817
      %v1146 = vunpack.c.l.b16 %v818
      %v1147 = vunpack.c.l.b16 %v819
      %v1148 = vpack.c.b16 %v1141, %v1140
      %v1149 = vpack.c.b16 %v1143, %v1142
      %v1150 = vpack.c.b16 %v1145, %v1144
      %v1151 = vpack.c.b16 %v1147, %v1146
      %v1160 = vunpack.c.l.b16 %v844
      %v1161 = vunpack.c.l.b16 %v845
      %v1162 = vunpack.c.l.b16 %v846
      %v1163 = vunpack.c.l.b16 %v847
      %v1164 = vunpack.c.l.b16 %v848
      %v1165 = vunpack.c.l.b16 %v849
      %v1166 = vunpack.c.l.b16 %v850
      %v1167 = vunpack.c.l.b16 %v851
      %v1168 = vpack.c.b16 %v1161, %v1160
      %v1169 = vpack.c.b16 %v1163, %v1162
      %v1170 = vpack.c.b16 %v1165, %v1164
      %v1171 = vpack.c.b16 %v1167, %v1166
      %v1173 = vsel %vm892, %v1148, 0
      %v1176 = vsel %vm892, %v1149, 0
      %v1179 = vsel %vm892, %v1150, 0
      %v1182 = vsel %vm892, %v1151, 0
      %v1185 = vsel %vm892, %v1168, 0
      %v1188 = vsel %vm892, %v1169, 0
      %v1191 = vsel %vm892, %v1170, 0
      %v1194 = vsel %vm892, %v1171, 0
      %1196 = vmatpush.bf16.xpose.msra.mxu0 0
      %1197 = vmatpush.bf16.xpose.msra.mxu0 0
      %1198 = vmatpush.bf16.xpose.msra.mxu0 0
      %1199 = vmatpush.bf16.xpose.msra.mxu0 0
      %1200 = vmatpush.bf16.xpose.msra.mxu0 %v1194
      %1201 = vmatpush.bf16.xpose.msra.mxu0 %v1191
      %1202 = vmatpush.bf16.xpose.msra.mxu0 %v1188
      %1203 = vmatpush.bf16.xpose.msra.mxu0 %v1185
      %1204 = vmatmul.bf16.gmra.mxu0 %v1173
      %v1205 = vpop.f32.mrf.mxu0
      %v1206 = vadd.f32 0.0, %v1205
      %v1207 = vpop.f32.mrf.mxu0
      %v1208 = vadd.f32 0.0, %v1207
      %1209 = vmatmul.bf16.gmra.mxu0 %v1176
      %v1210 = vpop.f32.mrf.mxu0
      %v1211 = vadd.f32 0.0, %v1210
      %v1212 = vpop.f32.mrf.mxu0
      %v1213 = vadd.f32 0.0, %v1212
      %1214 = vmatmul.bf16.gmra.mxu0 %v1179
      %v1215 = vpop.f32.mrf.mxu0
      %v1216 = vadd.f32 0.0, %v1215
      %v1217 = vpop.f32.mrf.mxu0
      %v1218 = vadd.f32 0.0, %v1217
      %1219 = vmatmul.bf16.gmra.mxu0 %v1182
      %v1220 = vpop.f32.mrf.mxu0
      %v1221 = vadd.f32 0.0, %v1220
      %v1222 = vpop.f32.mrf.mxu0
      %v1223 = vadd.f32 0.0, %v1222
      %1224 = vdwg.mxu0
      %vm1225 = vcmask 523264
      %v1226 = vsel %vm1225, %v927, -inf
      %1227 = vmax.xlane.f32.xlu0 %v1226
      %v1228 = vpop.xlane.xlu0 %1227
      %v1229 = vsel %vm1225, %v929, -inf
      %1230 = vmax.xlane.f32.xlu0 %v1229
      %v1231 = vpop.xlane.xlu0 %1230
      %v1232 = vsel %vm1225, %v932, -inf
      %1233 = vmax.xlane.f32.xlu0 %v1232
      %v1234 = vpop.xlane.xlu0 %1233
      %v1235 = vsel %vm1225, %v934, -inf
      %1236 = vmax.xlane.f32.xlu0 %v1235
      %v1237 = vpop.xlane.xlu0 %1236
      %v1238 = vsel %vm1225, %v937, -inf
      %1239 = vmax.xlane.f32.xlu0 %v1238
      %v1240 = vpop.xlane.xlu0 %1239
      %v1241 = vsel %vm1225, %v939, -inf
      %1242 = vmax.xlane.f32.xlu0 %v1241
      %v1243 = vpop.xlane.xlu0 %1242
      %v1244 = vsel %vm1225, %v942, -inf
      %1245 = vmax.xlane.f32.xlu0 %v1244
      %v1246 = vpop.xlane.xlu0 %1245
      %v1247 = vsel %vm1225, %v944, -inf
      %1248 = vmax.xlane.f32.xlu0 %v1247
      %v1249 = vpop.xlane.xlu0 %1248
      %v1250 = vsel %vm1225, %v1020, -inf
      %1251 = vmax.xlane.f32.xlu0 %v1250
      %v1252 = vpop.xlane.xlu0 %1251
      %v1253 = vsel %vm1225, %v1022, -inf
      %1254 = vmax.xlane.f32.xlu0 %v1253
      %v1255 = vpop.xlane.xlu0 %1254
      %v1256 = vsel %vm1225, %v1025, -inf
      %1257 = vmax.xlane.f32.xlu0 %v1256
      %v1258 = vpop.xlane.xlu0 %1257
      %v1259 = vsel %vm1225, %v1027, -inf
      %1260 = vmax.xlane.f32.xlu0 %v1259
      %v1261 = vpop.xlane.xlu0 %1260
      %v1262 = vsel %vm1225, %v1030, -inf
      %1263 = vmax.xlane.f32.xlu0 %v1262
      %v1264 = vpop.xlane.xlu0 %1263
      %v1265 = vsel %vm1225, %v1032, -inf
      %1266 = vmax.xlane.f32.xlu0 %v1265
      %v1267 = vpop.xlane.xlu0 %1266
      %v1268 = vsel %vm1225, %v1035, -inf
      %1269 = vmax.xlane.f32.xlu0 %v1268
      %v1270 = vpop.xlane.xlu0 %1269
      %v1271 = vsel %vm1225, %v1037, -inf
      %1272 = vmax.xlane.f32.xlu0 %v1271
      %v1273 = vpop.xlane.xlu0 %1272
      %v1274 = vsel %vm1225, %v1113, -inf
      %1275 = vmax.xlane.f32.xlu0 %v1274
      %v1276 = vpop.xlane.xlu0 %1275
      %v1277 = vsel %vm1225, %v1115, -inf
      %1278 = vmax.xlane.f32.xlu0 %v1277
      %v1279 = vpop.xlane.xlu0 %1278
      %v1280 = vsel %vm1225, %v1118, -inf
      %1281 = vmax.xlane.f32.xlu0 %v1280
      %v1282 = vpop.xlane.xlu0 %1281
      %v1283 = vsel %vm1225, %v1120, -inf
      %1284 = vmax.xlane.f32.xlu0 %v1283
      %v1285 = vpop.xlane.xlu0 %1284
      %v1286 = vsel %vm1225, %v1123, -inf
      %1287 = vmax.xlane.f32.xlu0 %v1286
      %v1288 = vpop.xlane.xlu0 %1287
      %v1289 = vsel %vm1225, %v1125, -inf
      %1290 = vmax.xlane.f32.xlu0 %v1289
      %v1291 = vpop.xlane.xlu0 %1290
      %v1292 = vsel %vm1225, %v1128, -inf
      %1293 = vmax.xlane.f32.xlu0 %v1292
      %v1294 = vpop.xlane.xlu0 %1293
      %v1295 = vsel %vm1225, %v1130, -inf
      %1296 = vmax.xlane.f32.xlu0 %v1295
      %v1297 = vpop.xlane.xlu0 %1296
      %v1298 = vsel %vm1225, %v1206, -inf
      %1299 = vmax.xlane.f32.xlu0 %v1298
      %v1300 = vpop.xlane.xlu0 %1299
      %v1301 = vsel %vm1225, %v1208, -inf
      %1302 = vmax.xlane.f32.xlu0 %v1301
      %v1303 = vpop.xlane.xlu0 %1302
      %v1304 = vsel %vm1225, %v1211, -inf
      %1305 = vmax.xlane.f32.xlu0 %v1304
      %v1306 = vpop.xlane.xlu0 %1305
      %v1307 = vsel %vm1225, %v1213, -inf
      %1308 = vmax.xlane.f32.xlu0 %v1307
      %v1309 = vpop.xlane.xlu0 %1308
      %v1310 = vsel %vm1225, %v1216, -inf
      %1311 = vmax.xlane.f32.xlu0 %v1310
      %v1312 = vpop.xlane.xlu0 %1311
      %v1313 = vsel %vm1225, %v1218, -inf
      %1314 = vmax.xlane.f32.xlu0 %v1313
      %v1315 = vpop.xlane.xlu0 %1314
      %v1316 = vsel %vm1225, %v1221, -inf
      %1317 = vmax.xlane.f32.xlu0 %v1316
      %v1318 = vpop.xlane.xlu0 %1317
      %v1319 = vsel %vm1225, %v1223, -inf
      %1320 = vmax.xlane.f32.xlu0 %v1319
      %v1321 = vpop.xlane.xlu0 %1320
      %v1322 = vsub.f32 %v927, %v1228
      %v1323 = vsub.f32 %v929, %v1231
      %v1324 = vsub.f32 %v932, %v1234
      %v1325 = vsub.f32 %v934, %v1237
      %v1326 = vsub.f32 %v937, %v1240
      %v1327 = vsub.f32 %v939, %v1243
      %v1328 = vsub.f32 %v942, %v1246
      %v1329 = vsub.f32 %v944, %v1249
      %v1330 = vsub.f32 %v1020, %v1252
      %v1331 = vsub.f32 %v1022, %v1255
      %v1332 = vsub.f32 %v1025, %v1258
      %v1333 = vsub.f32 %v1027, %v1261
      %v1334 = vsub.f32 %v1030, %v1264
      %v1335 = vsub.f32 %v1032, %v1267
      %v1336 = vsub.f32 %v1035, %v1270
      %v1337 = vsub.f32 %v1037, %v1273
      %v1338 = vsub.f32 %v1113, %v1276
      %v1339 = vsub.f32 %v1115, %v1279
      %v1340 = vsub.f32 %v1118, %v1282
      %v1341 = vsub.f32 %v1120, %v1285
      %v1342 = vsub.f32 %v1123, %v1288
      %v1343 = vsub.f32 %v1125, %v1291
      %v1344 = vsub.f32 %v1128, %v1294
      %v1345 = vsub.f32 %v1130, %v1297
      %v1346 = vsub.f32 %v1206, %v1300
      %v1347 = vsub.f32 %v1208, %v1303
      %v1348 = vsub.f32 %v1211, %v1306
      %v1349 = vsub.f32 %v1213, %v1309
      %v1350 = vsub.f32 %v1216, %v1312
      %v1351 = vsub.f32 %v1218, %v1315
      %v1352 = vsub.f32 %v1221, %v1318
      %v1353 = vsub.f32 %v1223, %v1321
      %v1354 = vmul.f32 %v1322, 1.442695
      %v1355 = vpow.pop %v1354
      %v1356 = vmul.f32 %v1323, 1.442695
      %v1357 = vpow.pop %v1356
      %v1358 = vmul.f32 %v1324, 1.442695
      %v1359 = vpow.pop %v1358
      %v1360 = vmul.f32 %v1325, 1.442695
      %v1361 = vpow.pop %v1360
      %v1362 = vmul.f32 %v1326, 1.442695
      %v1363 = vpow.pop %v1362
      %v1364 = vmul.f32 %v1327, 1.442695
      %v1365 = vpow.pop %v1364
      %v1366 = vmul.f32 %v1328, 1.442695
      %v1367 = vpow.pop %v1366
      %v1368 = vmul.f32 %v1329, 1.442695
      %v1369 = vpow.pop %v1368
      %v1370 = vmul.f32 %v1330, 1.442695
      %v1371 = vpow.pop %v1370
      %v1372 = vmul.f32 %v1331, 1.442695
      %v1373 = vpow.pop %v1372
      %v1374 = vmul.f32 %v1332, 1.442695
      %v1375 = vpow.pop %v1374
      %v1376 = vmul.f32 %v1333, 1.442695
      %v1377 = vpow.pop %v1376
      %v1378 = vmul.f32 %v1334, 1.442695
      %v1379 = vpow.pop %v1378
      %v1380 = vmul.f32 %v1335, 1.442695
      %v1381 = vpow.pop %v1380
      %v1382 = vmul.f32 %v1336, 1.442695
      %v1383 = vpow.pop %v1382
      %v1384 = vmul.f32 %v1337, 1.442695
      %v1385 = vpow.pop %v1384
      %v1386 = vmul.f32 %v1338, 1.442695
      %v1387 = vpow.pop %v1386
      %v1388 = vmul.f32 %v1339, 1.442695
      %v1389 = vpow.pop %v1388
      %v1390 = vmul.f32 %v1340, 1.442695
      %v1391 = vpow.pop %v1390
      %v1392 = vmul.f32 %v1341, 1.442695
      %v1393 = vpow.pop %v1392
      %v1394 = vmul.f32 %v1342, 1.442695
      %v1395 = vpow.pop %v1394
      %v1396 = vmul.f32 %v1343, 1.442695
      %v1397 = vpow.pop %v1396
      %v1398 = vmul.f32 %v1344, 1.442695
      %v1399 = vpow.pop %v1398
      %v1400 = vmul.f32 %v1345, 1.442695
      %v1401 = vpow.pop %v1400
      %v1402 = vmul.f32 %v1346, 1.442695
      %v1403 = vpow.pop %v1402
      %v1404 = vmul.f32 %v1347, 1.442695
      %v1405 = vpow.pop %v1404
      %v1406 = vmul.f32 %v1348, 1.442695
      %v1407 = vpow.pop %v1406
      %v1408 = vmul.f32 %v1349, 1.442695
      %v1409 = vpow.pop %v1408
      %v1410 = vmul.f32 %v1350, 1.442695
      %v1411 = vpow.pop %v1410
      %v1412 = vmul.f32 %v1351, 1.442695
      %v1413 = vpow.pop %v1412
      %v1414 = vmul.f32 %v1352, 1.442695
      %v1415 = vpow.pop %v1414
      %v1416 = vmul.f32 %v1353, 1.442695
      %v1417 = vpow.pop %v1416
      %v1418 = vsel %vm1225, %v1355, 0.0
      %1419 = vadd.xlane.f32.xlu0 %v1418
      %v1420 = vpop.xlane.xlu0 %1419
      %v1421 = vsel %vm1225, %v1357, 0.0
      %1422 = vadd.xlane.f32.xlu0 %v1421
      %v1423 = vpop.xlane.xlu0 %1422
      %v1424 = vsel %vm1225, %v1359, 0.0
      %1425 = vadd.xlane.f32.xlu0 %v1424
      %v1426 = vpop.xlane.xlu0 %1425
      %v1427 = vsel %vm1225, %v1361, 0.0
      %1428 = vadd.xlane.f32.xlu0 %v1427
      %v1429 = vpop.xlane.xlu0 %1428
      %v1430 = vsel %vm1225, %v1363, 0.0
      %1431 = vadd.xlane.f32.xlu0 %v1430
      %v1432 = vpop.xlane.xlu0 %1431
      %v1433 = vsel %vm1225, %v1365, 0.0
      %1434 = vadd.xlane.f32.xlu0 %v1433
      %v1435 = vpop.xlane.xlu0 %1434
      %v1436 = vsel %vm1225, %v1367, 0.0
      %1437 = vadd.xlane.f32.xlu0 %v1436
      %v1438 = vpop.xlane.xlu0 %1437
      %v1439 = vsel %vm1225, %v1369, 0.0
      %1440 = vadd.xlane.f32.xlu0 %v1439
      %v1441 = vpop.xlane.xlu0 %1440
      %v1442 = vsel %vm1225, %v1371, 0.0
      %1443 = vadd.xlane.f32.xlu0 %v1442
      %v1444 = vpop.xlane.xlu0 %1443
      %v1445 = vsel %vm1225, %v1373, 0.0
      %1446 = vadd.xlane.f32.xlu0 %v1445
      %v1447 = vpop.xlane.xlu0 %1446
      %v1448 = vsel %vm1225, %v1375, 0.0
      %1449 = vadd.xlane.f32.xlu0 %v1448
      %v1450 = vpop.xlane.xlu0 %1449
      %v1451 = vsel %vm1225, %v1377, 0.0
      %1452 = vadd.xlane.f32.xlu0 %v1451
      %v1453 = vpop.xlane.xlu0 %1452
      %v1454 = vsel %vm1225, %v1379, 0.0
      %1455 = vadd.xlane.f32.xlu0 %v1454
      %v1456 = vpop.xlane.xlu0 %1455
      %v1457 = vsel %vm1225, %v1381, 0.0
      %1458 = vadd.xlane.f32.xlu0 %v1457
      %v1459 = vpop.xlane.xlu0 %1458
      %v1460 = vsel %vm1225, %v1383, 0.0
      %1461 = vadd.xlane.f32.xlu0 %v1460
      %v1462 = vpop.xlane.xlu0 %1461
      %v1463 = vsel %vm1225, %v1385, 0.0
      %1464 = vadd.xlane.f32.xlu0 %v1463
      %v1465 = vpop.xlane.xlu0 %1464
      %v1466 = vsel %vm1225, %v1387, 0.0
      %1467 = vadd.xlane.f32.xlu0 %v1466
      %v1468 = vpop.xlane.xlu0 %1467
      %v1469 = vsel %vm1225, %v1389, 0.0
      %1470 = vadd.xlane.f32.xlu0 %v1469
      %v1471 = vpop.xlane.xlu0 %1470
      %v1472 = vsel %vm1225, %v1391, 0.0
      %1473 = vadd.xlane.f32.xlu0 %v1472
      %v1474 = vpop.xlane.xlu0 %1473
      %v1475 = vsel %vm1225, %v1393, 0.0
      %1476 = vadd.xlane.f32.xlu0 %v1475
      %v1477 = vpop.xlane.xlu0 %1476
      %v1478 = vsel %vm1225, %v1395, 0.0
      %1479 = vadd.xlane.f32.xlu0 %v1478
      %v1480 = vpop.xlane.xlu0 %1479
      %v1481 = vsel %vm1225, %v1397, 0.0
      %1482 = vadd.xlane.f32.xlu0 %v1481
      %v1483 = vpop.xlane.xlu0 %1482
      %v1484 = vsel %vm1225, %v1399, 0.0
      %1485 = vadd.xlane.f32.xlu0 %v1484
      %v1486 = vpop.xlane.xlu0 %1485
      %v1487 = vsel %vm1225, %v1401, 0.0
      %1488 = vadd.xlane.f32.xlu0 %v1487
      %v1489 = vpop.xlane.xlu0 %1488
      %v1490 = vsel %vm1225, %v1403, 0.0
      %1491 = vadd.xlane.f32.xlu0 %v1490
      %v1492 = vpop.xlane.xlu0 %1491
      %v1493 = vsel %vm1225, %v1405, 0.0
      %1494 = vadd.xlane.f32.xlu0 %v1493
      %v1495 = vpop.xlane.xlu0 %1494
      %v1496 = vsel %vm1225, %v1407, 0.0
      %1497 = vadd.xlane.f32.xlu0 %v1496
      %v1498 = vpop.xlane.xlu0 %1497
      %v1499 = vsel %vm1225, %v1409, 0.0
      %1500 = vadd.xlane.f32.xlu0 %v1499
      %v1501 = vpop.xlane.xlu0 %1500
      %v1502 = vsel %vm1225, %v1411, 0.0
      %1503 = vadd.xlane.f32.xlu0 %v1502
      %v1504 = vpop.xlane.xlu0 %1503
      %v1505 = vsel %vm1225, %v1413, 0.0
      %1506 = vadd.xlane.f32.xlu0 %v1505
      %v1507 = vpop.xlane.xlu0 %1506
      %v1508 = vsel %vm1225, %v1415, 0.0
      %1509 = vadd.xlane.f32.xlu0 %v1508
      %v1510 = vpop.xlane.xlu0 %1509
      %v1511 = vsel %vm1225, %v1417, 0.0
      %1512 = vadd.xlane.f32.xlu0 %v1511
      %v1513 = vpop.xlane.xlu0 %1512
      %v1514 = vrcp.pop %v1420
      %v1515 = vrcp.pop %v1423
      %v1516 = vrcp.pop %v1426
      %v1517 = vrcp.pop %v1429
      %v1518 = vrcp.pop %v1432
      %v1519 = vrcp.pop %v1435
      %v1520 = vrcp.pop %v1438
      %v1521 = vrcp.pop %v1441
      %v1522 = vrcp.pop %v1444
      %v1523 = vrcp.pop %v1447
      %v1524 = vrcp.pop %v1450
      %v1525 = vrcp.pop %v1453
      %v1526 = vrcp.pop %v1456
      %v1527 = vrcp.pop %v1459
      %v1528 = vrcp.pop %v1462
      %v1529 = vrcp.pop %v1465
      %v1530 = vrcp.pop %v1468
      %v1531 = vrcp.pop %v1471
      %v1532 = vrcp.pop %v1474
      %v1533 = vrcp.pop %v1477
      %v1534 = vrcp.pop %v1480
      %v1535 = vrcp.pop %v1483
      %v1536 = vrcp.pop %v1486
      %v1537 = vrcp.pop %v1489
      %v1538 = vrcp.pop %v1492
      %v1539 = vrcp.pop %v1495
      %v1540 = vrcp.pop %v1498
      %v1541 = vrcp.pop %v1501
      %v1542 = vrcp.pop %v1504
      %v1543 = vrcp.pop %v1507
      %v1544 = vrcp.pop %v1510
      %v1545 = vrcp.pop %v1513
      %v1546 = vmul.f32 %v1355, %v1514
      %v1547 = vmul.f32 %v1357, %v1515
      %v1548 = vmul.f32 %v1359, %v1516
      %v1549 = vmul.f32 %v1361, %v1517
      %v1550 = vmul.f32 %v1363, %v1518
      %v1551 = vmul.f32 %v1365, %v1519
      %v1552 = vmul.f32 %v1367, %v1520
      %v1553 = vmul.f32 %v1369, %v1521
      %v1554 = vmul.f32 %v1371, %v1522
      %v1555 = vmul.f32 %v1373, %v1523
      %v1556 = vmul.f32 %v1375, %v1524
      %v1557 = vmul.f32 %v1377, %v1525
      %v1558 = vmul.f32 %v1379, %v1526
      %v1559 = vmul.f32 %v1381, %v1527
      %v1560 = vmul.f32 %v1383, %v1528
      %v1561 = vmul.f32 %v1385, %v1529
      %v1562 = vmul.f32 %v1387, %v1530
      %v1563 = vmul.f32 %v1389, %v1531
      %v1564 = vmul.f32 %v1391, %v1532
      %v1565 = vmul.f32 %v1393, %v1533
      %v1566 = vmul.f32 %v1395, %v1534
      %v1567 = vmul.f32 %v1397, %v1535
      %v1568 = vmul.f32 %v1399, %v1536
      %v1569 = vmul.f32 %v1401, %v1537
      %v1570 = vmul.f32 %v1403, %v1538
      %v1571 = vmul.f32 %v1405, %v1539
      %v1572 = vmul.f32 %v1407, %v1540
      %v1573 = vmul.f32 %v1409, %v1541
      %v1574 = vmul.f32 %v1411, %v1542
      %v1575 = vmul.f32 %v1413, %v1543
      %v1576 = vmul.f32 %v1415, %v1544
      %v1577 = vmul.f32 %v1417, %v1545
      %v1578 = vpack.c.bf16 %v1546, %v1546
      %v1579 = vpack.c.bf16 %v1547, %v1547
      %v1580 = vpack.c.bf16 %v1548, %v1548
      %v1581 = vpack.c.bf16 %v1549, %v1549
      %v1582 = vpack.c.bf16 %v1550, %v1550
      %v1583 = vpack.c.bf16 %v1551, %v1551
      %v1584 = vpack.c.bf16 %v1552, %v1552
      %v1585 = vpack.c.bf16 %v1553, %v1553
      %v1586 = vpack.c.bf16 %v1554, %v1554
      %v1587 = vpack.c.bf16 %v1555, %v1555
      %v1588 = vpack.c.bf16 %v1556, %v1556
      %v1589 = vpack.c.bf16 %v1557, %v1557
      %v1590 = vpack.c.bf16 %v1558, %v1558
      %v1591 = vpack.c.bf16 %v1559, %v1559
      %v1592 = vpack.c.bf16 %v1560, %v1560
      %v1593 = vpack.c.bf16 %v1561, %v1561
      %v1594 = vpack.c.bf16 %v1562, %v1562
      %v1595 = vpack.c.bf16 %v1563, %v1563
      %v1596 = vpack.c.bf16 %v1564, %v1564
      %v1597 = vpack.c.bf16 %v1565, %v1565
      %v1598 = vpack.c.bf16 %v1566, %v1566
      %v1599 = vpack.c.bf16 %v1567, %v1567
      %v1600 = vpack.c.bf16 %v1568, %v1568
      %v1601 = vpack.c.bf16 %v1569, %v1569
      %v1602 = vpack.c.bf16 %v1570, %v1570
      %v1603 = vpack.c.bf16 %v1571, %v1571
      %v1604 = vpack.c.bf16 %v1572, %v1572
      %v1605 = vpack.c.bf16 %v1573, %v1573
      %v1606 = vpack.c.bf16 %v1574, %v1574
      %v1607 = vpack.c.bf16 %v1575, %v1575
      %v1608 = vpack.c.bf16 %v1576, %v1576
      %v1609 = vpack.c.bf16 %v1577, %v1577
      %v1610 = vpack.c.bf16 %v646, %v646
      %v1611 = vpack.c.bf16 %v648, %v648
      %v1612 = vpack.c.bf16 %v651, %v651
      %v1613 = vpack.c.bf16 %v653, %v653
      %v1614 = vpack.c.bf16 %v656, %v656
      %v1615 = vpack.c.bf16 %v658, %v658
      %v1616 = vpack.c.bf16 %v661, %v661
      %v1617 = vpack.c.bf16 %v663, %v663
      %v1618 = vpack.c.bf16 %v687, %v687
      %v1619 = vpack.c.bf16 %v689, %v689
      %v1620 = vpack.c.bf16 %v692, %v692
      %v1621 = vpack.c.bf16 %v694, %v694
      %v1622 = vpack.c.bf16 %v697, %v697
      %v1623 = vpack.c.bf16 %v699, %v699
      %v1624 = vpack.c.bf16 %v702, %v702
      %v1625 = vpack.c.bf16 %v704, %v704
      %v1626 = vpack.c.bf16 %v728, %v728
      %v1627 = vpack.c.bf16 %v730, %v730
      %v1628 = vpack.c.bf16 %v733, %v733
      %v1629 = vpack.c.bf16 %v735, %v735
      %v1630 = vpack.c.bf16 %v738, %v738
      %v1631 = vpack.c.bf16 %v740, %v740
      %v1632 = vpack.c.bf16 %v743, %v743
      %v1633 = vpack.c.bf16 %v745, %v745
      %v1634 = vpack.c.bf16 %v769, %v769
      %v1635 = vpack.c.bf16 %v771, %v771
      %v1636 = vpack.c.bf16 %v774, %v774
      %v1637 = vpack.c.bf16 %v776, %v776
      %v1638 = vpack.c.bf16 %v779, %v779
      %v1639 = vpack.c.bf16 %v781, %v781
      %v1640 = vpack.c.bf16 %v784, %v784
      %v1641 = vpack.c.bf16 %v786, %v786
      %v1650 = vunpack.c.l.b16 %v1578
      %v1651 = vunpack.c.l.b16 %v1579
      %v1652 = vunpack.c.l.b16 %v1580
      %v1653 = vunpack.c.l.b16 %v1581
      %v1654 = vunpack.c.l.b16 %v1582
      %v1655 = vunpack.c.l.b16 %v1583
      %v1656 = vunpack.c.l.b16 %v1584
      %v1657 = vunpack.c.l.b16 %v1585
      %v1658 = vpack.c.b16 %v1651, %v1650
      %v1659 = vpack.c.b16 %v1653, %v1652
      %v1660 = vpack.c.b16 %v1655, %v1654
      %v1661 = vpack.c.b16 %v1657, %v1656
      %v1670 = vunpack.c.l.b16 %v1610
      %v1671 = vunpack.c.l.b16 %v1611
      %v1672 = vunpack.c.l.b16 %v1612
      %v1673 = vunpack.c.l.b16 %v1613
      %v1674 = vunpack.c.l.b16 %v1614
      %v1675 = vunpack.c.l.b16 %v1615
      %v1676 = vunpack.c.l.b16 %v1616
      %v1677 = vunpack.c.l.b16 %v1617
      %v1678 = vpack.c.b16 %v1671, %v1670
      %v1679 = vpack.c.b16 %v1673, %v1672
      %v1680 = vpack.c.b16 %v1675, %v1674
      %v1681 = vpack.c.b16 %v1677, %v1676
      %v1687 = vsel %vm1225, %v1658, 0
      %v1690 = vsel %vm1225, %v1659, 0
      %v1693 = vsel %vm1225, %v1660, 0
      %v1696 = vsel %vm1225, %v1661, 0
      %1698 = vmatpush.bf16.msra.mxu0 0
      %1699 = vmatpush.bf16.msra.mxu0 0
      %1700 = vmatpush.bf16.msra.mxu0 0
      %1701 = vmatpush.bf16.msra.mxu0 0
      %1702 = vmatpush.bf16.msra.mxu0 %v1681
      %1703 = vmatpush.bf16.msra.mxu0 %v1680
      %1704 = vmatpush.bf16.msra.mxu0 %v1679
      %1705 = vmatpush.bf16.msra.mxu0 %v1678
      %1706 = vmatmul.bf16.gmra.mxu0 %v1687
      %v1707 = vpop.f32.mrf.mxu0
      %v1708 = vadd.f32 0.0, %v1707
      %v1709 = vpop.f32.mrf.mxu0
      %v1710 = vadd.f32 0.0, %v1709
      %1711 = vmatmul.bf16.gmra.mxu0 %v1690
      %v1712 = vpop.f32.mrf.mxu0
      %v1713 = vadd.f32 0.0, %v1712
      %v1714 = vpop.f32.mrf.mxu0
      %v1715 = vadd.f32 0.0, %v1714
      %1716 = vmatmul.bf16.gmra.mxu0 %v1693
      %v1717 = vpop.f32.mrf.mxu0
      %v1718 = vadd.f32 0.0, %v1717
      %v1719 = vpop.f32.mrf.mxu0
      %v1720 = vadd.f32 0.0, %v1719
      %1721 = vmatmul.bf16.gmra.mxu0 %v1696
      %v1722 = vpop.f32.mrf.mxu0
      %v1723 = vadd.f32 0.0, %v1722
      %v1724 = vpop.f32.mrf.mxu0
      %v1725 = vadd.f32 0.0, %v1724
      %1726 = vdwg.mxu0
      %v1735 = vunpack.c.l.b16 %v1586
      %v1736 = vunpack.c.l.b16 %v1587
      %v1737 = vunpack.c.l.b16 %v1588
      %v1738 = vunpack.c.l.b16 %v1589
      %v1739 = vunpack.c.l.b16 %v1590
      %v1740 = vunpack.c.l.b16 %v1591
      %v1741 = vunpack.c.l.b16 %v1592
      %v1742 = vunpack.c.l.b16 %v1593
      %v1743 = vpack.c.b16 %v1736, %v1735
      %v1744 = vpack.c.b16 %v1738, %v1737
      %v1745 = vpack.c.b16 %v1740, %v1739
      %v1746 = vpack.c.b16 %v1742, %v1741
      %v1755 = vunpack.c.l.b16 %v1618
      %v1756 = vunpack.c.l.b16 %v1619
      %v1757 = vunpack.c.l.b16 %v1620
      %v1758 = vunpack.c.l.b16 %v1621
      %v1759 = vunpack.c.l.b16 %v1622
      %v1760 = vunpack.c.l.b16 %v1623
      %v1761 = vunpack.c.l.b16 %v1624
      %v1762 = vunpack.c.l.b16 %v1625
      %v1763 = vpack.c.b16 %v1756, %v1755
      %v1764 = vpack.c.b16 %v1758, %v1757
      %v1765 = vpack.c.b16 %v1760, %v1759
      %v1766 = vpack.c.b16 %v1762, %v1761
      %v1772 = vsel %vm1225, %v1743, 0
      %v1775 = vsel %vm1225, %v1744, 0
      %v1778 = vsel %vm1225, %v1745, 0
      %v1781 = vsel %vm1225, %v1746, 0
      %1783 = vmatpush.bf16.msra.mxu0 0
      %1784 = vmatpush.bf16.msra.mxu0 0
      %1785 = vmatpush.bf16.msra.mxu0 0
      %1786 = vmatpush.bf16.msra.mxu0 0
      %1787 = vmatpush.bf16.msra.mxu0 %v1766
      %1788 = vmatpush.bf16.msra.mxu0 %v1765
      %1789 = vmatpush.bf16.msra.mxu0 %v1764
      %1790 = vmatpush.bf16.msra.mxu0 %v1763
      %1791 = vmatmul.bf16.gmra.mxu0 %v1772
      %v1792 = vpop.f32.mrf.mxu0
      %v1793 = vadd.f32 0.0, %v1792
      %v1794 = vpop.f32.mrf.mxu0
      %v1795 = vadd.f32 0.0, %v1794
      %1796 = vmatmul.bf16.gmra.mxu0 %v1775
      %v1797 = vpop.f32.mrf.mxu0
      %v1798 = vadd.f32 0.0, %v1797
      %v1799 = vpop.f32.mrf.mxu0
      %v1800 = vadd.f32 0.0, %v1799
      %1801 = vmatmul.bf16.gmra.mxu0 %v1778
      %v1802 = vpop.f32.mrf.mxu0
      %v1803 = vadd.f32 0.0, %v1802
      %v1804 = vpop.f32.mrf.mxu0
      %v1805 = vadd.f32 0.0, %v1804
      %1806 = vmatmul.bf16.gmra.mxu0 %v1781
      %v1807 = vpop.f32.mrf.mxu0
      %v1808 = vadd.f32 0.0, %v1807
      %v1809 = vpop.f32.mrf.mxu0
      %v1810 = vadd.f32 0.0, %v1809
      %1811 = vdwg.mxu0
      %v1820 = vunpack.c.l.b16 %v1594
      %v1821 = vunpack.c.l.b16 %v1595
      %v1822 = vunpack.c.l.b16 %v1596
      %v1823 = vunpack.c.l.b16 %v1597
      %v1824 = vunpack.c.l.b16 %v1598
      %v1825 = vunpack.c.l.b16 %v1599
      %v1826 = vunpack.c.l.b16 %v1600
      %v1827 = vunpack.c.l.b16 %v1601
      %v1828 = vpack.c.b16 %v1821, %v1820
      %v1829 = vpack.c.b16 %v1823, %v1822
      %v1830 = vpack.c.b16 %v1825, %v1824
      %v1831 = vpack.c.b16 %v1827, %v1826
      %v1840 = vunpack.c.l.b16 %v1626
      %v1841 = vunpack.c.l.b16 %v1627
      %v1842 = vunpack.c.l.b16 %v1628
      %v1843 = vunpack.c.l.b16 %v1629
      %v1844 = vunpack.c.l.b16 %v1630
      %v1845 = vunpack.c.l.b16 %v1631
      %v1846 = vunpack.c.l.b16 %v1632
      %v1847 = vunpack.c.l.b16 %v1633
      %v1848 = vpack.c.b16 %v1841, %v1840
      %v1849 = vpack.c.b16 %v1843, %v1842
      %v1850 = vpack.c.b16 %v1845, %v1844
      %v1851 = vpack.c.b16 %v1847, %v1846
      %v1857 = vsel %vm1225, %v1828, 0
      %v1860 = vsel %vm1225, %v1829, 0
      %v1863 = vsel %vm1225, %v1830, 0
      %v1866 = vsel %vm1225, %v1831, 0
      %1868 = vmatpush.bf16.msra.mxu0 0
      %1869 = vmatpush.bf16.msra.mxu0 0
      %1870 = vmatpush.bf16.msra.mxu0 0
      %1871 = vmatpush.bf16.msra.mxu0 0
      %1872 = vmatpush.bf16.msra.mxu0 %v1851
      %1873 = vmatpush.bf16.msra.mxu0 %v1850
      %1874 = vmatpush.bf16.msra.mxu0 %v1849
      %1875 = vmatpush.bf16.msra.mxu0 %v1848
      %1876 = vmatmul.bf16.gmra.mxu0 %v1857
      %v1877 = vpop.f32.mrf.mxu0
      %v1878 = vadd.f32 0.0, %v1877
      %v1879 = vpop.f32.mrf.mxu0
      %v1880 = vadd.f32 0.0, %v1879
      %1881 = vmatmul.bf16.gmra.mxu0 %v1860
      %v1882 = vpop.f32.mrf.mxu0
      %v1883 = vadd.f32 0.0, %v1882
      %v1884 = vpop.f32.mrf.mxu0
      %v1885 = vadd.f32 0.0, %v1884
      %1886 = vmatmul.bf16.gmra.mxu0 %v1863
      %v1887 = vpop.f32.mrf.mxu0
      %v1888 = vadd.f32 0.0, %v1887
      %v1889 = vpop.f32.mrf.mxu0
      %v1890 = vadd.f32 0.0, %v1889
      %1891 = vmatmul.bf16.gmra.mxu0 %v1866
      %v1892 = vpop.f32.mrf.mxu0
      %v1893 = vadd.f32 0.0, %v1892
      %v1894 = vpop.f32.mrf.mxu0
      %v1895 = vadd.f32 0.0, %v1894
      %1896 = vdwg.mxu0
      %v1905 = vunpack.c.l.b16 %v1602
      %v1906 = vunpack.c.l.b16 %v1603
      %v1907 = vunpack.c.l.b16 %v1604
      %v1908 = vunpack.c.l.b16 %v1605
      %v1909 = vunpack.c.l.b16 %v1606
      %v1910 = vunpack.c.l.b16 %v1607
      %v1911 = vunpack.c.l.b16 %v1608
      %v1912 = vunpack.c.l.b16 %v1609
      %v1913 = vpack.c.b16 %v1906, %v1905
      %v1914 = vpack.c.b16 %v1908, %v1907
      %v1915 = vpack.c.b16 %v1910, %v1909
      %v1916 = vpack.c.b16 %v1912, %v1911
      %v1925 = vunpack.c.l.b16 %v1634
      %v1926 = vunpack.c.l.b16 %v1635
      %v1927 = vunpack.c.l.b16 %v1636
      %v1928 = vunpack.c.l.b16 %v1637
      %v1929 = vunpack.c.l.b16 %v1638
      %v1930 = vunpack.c.l.b16 %v1639
      %v1931 = vunpack.c.l.b16 %v1640
      %v1932 = vunpack.c.l.b16 %v1641
      %v1933 = vpack.c.b16 %v1926, %v1925
      %v1934 = vpack.c.b16 %v1928, %v1927
      %v1935 = vpack.c.b16 %v1930, %v1929
      %v1936 = vpack.c.b16 %v1932, %v1931
      %v1942 = vsel %vm1225, %v1913, 0
      %v1945 = vsel %vm1225, %v1914, 0
      %v1948 = vsel %vm1225, %v1915, 0
      %v1951 = vsel %vm1225, %v1916, 0
      %1953 = vmatpush.bf16.msra.mxu0 0
      %1954 = vmatpush.bf16.msra.mxu0 0
      %1955 = vmatpush.bf16.msra.mxu0 0
      %1956 = vmatpush.bf16.msra.mxu0 0
      %1957 = vmatpush.bf16.msra.mxu0 %v1936
      %1958 = vmatpush.bf16.msra.mxu0 %v1935
      %1959 = vmatpush.bf16.msra.mxu0 %v1934
      %1960 = vmatpush.bf16.msra.mxu0 %v1933
      %1961 = vmatmul.bf16.gmra.mxu0 %v1942
      %v1962 = vpop.f32.mrf.mxu0
      %v1963 = vadd.f32 0.0, %v1962
      %v1964 = vpop.f32.mrf.mxu0
      %v1965 = vadd.f32 0.0, %v1964
      %1966 = vmatmul.bf16.gmra.mxu0 %v1945
      %v1967 = vpop.f32.mrf.mxu0
      %v1968 = vadd.f32 0.0, %v1967
      %v1969 = vpop.f32.mrf.mxu0
      %v1970 = vadd.f32 0.0, %v1969
      %1971 = vmatmul.bf16.gmra.mxu0 %v1948
      %v1972 = vpop.f32.mrf.mxu0
      %v1973 = vadd.f32 0.0, %v1972
      %v1974 = vpop.f32.mrf.mxu0
      %v1975 = vadd.f32 0.0, %v1974
      %1976 = vmatmul.bf16.gmra.mxu0 %v1951
      %v1977 = vpop.f32.mrf.mxu0
      %v1978 = vadd.f32 0.0, %v1977
      %v1979 = vpop.f32.mrf.mxu0
      %v1980 = vadd.f32 0.0, %v1979
      %1981 = vdwg.mxu0
      %v1982 = vpack.c.bf16 %v1708, %v1708
      %v1983 = vpack.c.bf16 %v1710, %v1710
      %v1984 = vpack.c.bf16 %v1713, %v1713
      %v1985 = vpack.c.bf16 %v1715, %v1715
      %v1986 = vpack.c.bf16 %v1718, %v1718
      %v1987 = vpack.c.bf16 %v1720, %v1720
      %v1988 = vpack.c.bf16 %v1723, %v1723
      %v1989 = vpack.c.bf16 %v1725, %v1725
      %v1990 = vpack.c.bf16 %v1793, %v1793
      %v1991 = vpack.c.bf16 %v1795, %v1795
      %v1992 = vpack.c.bf16 %v1798, %v1798
      %v1993 = vpack.c.bf16 %v1800, %v1800
      %v1994 = vpack.c.bf16 %v1803, %v1803
      %v1995 = vpack.c.bf16 %v1805, %v1805
      %v1996 = vpack.c.bf16 %v1808, %v1808
      %v1997 = vpack.c.bf16 %v1810, %v1810
      %v1998 = vpack.c.bf16 %v1878, %v1878
      %v1999 = vpack.c.bf16 %v1880, %v1880
      %v2000 = vpack.c.bf16 %v1883, %v1883
      %v2001 = vpack.c.bf16 %v1885, %v1885
      %v2002 = vpack.c.bf16 %v1888, %v1888
      %v2003 = vpack.c.bf16 %v1890, %v1890
      %v2004 = vpack.c.bf16 %v1893, %v1893
      %v2005 = vpack.c.bf16 %v1895, %v1895
      %v2006 = vpack.c.bf16 %v1963, %v1963
      %v2007 = vpack.c.bf16 %v1965, %v1965
      %v2008 = vpack.c.bf16 %v1968, %v1968
      %v2009 = vpack.c.bf16 %v1970, %v1970
      %v2010 = vpack.c.bf16 %v1973, %v1973
      %v2011 = vpack.c.bf16 %v1975, %v1975
      %v2012 = vpack.c.bf16 %v1978, %v1978
      %v2013 = vpack.c.bf16 %v1980, %v1980
      %v2014 = vld [vmem:[%s2] sm:$0xf]
      %v2015 = vld [vmem:[%s2 + $0x4] sm:$0xf]
      %v2016 = vld [vmem:[%s2 + $0x8] sm:$0xf]
      %v2017 = vld [vmem:[%s2 + $0xc] sm:$0xf]
      %v2026 = vunpack.c.l.b16 %v1982
      %v2027 = vunpack.c.l.b16 %v1983
      %v2028 = vunpack.c.l.b16 %v1984
      %v2029 = vunpack.c.l.b16 %v1985
      %v2030 = vunpack.c.l.b16 %v1986
      %v2031 = vunpack.c.l.b16 %v1987
      %v2032 = vunpack.c.l.b16 %v1988
      %v2033 = vunpack.c.l.b16 %v1989
      %v2034 = vpack.c.b16 %v2027, %v2026
      %v2035 = vpack.c.b16 %v2029, %v2028
      %v2036 = vpack.c.b16 %v2031, %v2030
      %v2037 = vpack.c.b16 %v2033, %v2032
      %v2039 = vsel %vm892, %v2034, 0
      %v2042 = vsel %vm892, %v2035, 0
      %v2045 = vsel %vm892, %v2036, 0
      %v2048 = vsel %vm892, %v2037, 0
      %vm2050 = vcmask 1043456
      %v2052 = vsel %vm2050, %v2014, 0
      %2054 = vmatpush.bf16.msra.mxu0 0
      %2055 = vmatpush.bf16.msra.mxu0 0
      %2056 = vmatpush.bf16.msra.mxu0 0
      %2057 = vmatpush.bf16.msra.mxu0 0
      %2058 = vmatpush.bf16.msra.mxu0 0
      %2059 = vmatpush.bf16.msra.mxu0 0
      %2060 = vmatpush.bf16.msra.mxu0 0
      %2061 = vmatpush.bf16.msra.mxu0 %v2052
      %2062 = vmatmul.bf16.gmra.mxu0 %v2039
      %v2063 = vpop.f32.mrf.mxu0
      %v2064 = vadd.f32 0.0, %v2063
      %v2065 = vpop.f32.mrf.mxu0
      %v2066 = vadd.f32 0.0, %v2065
      %2067 = vmatmul.bf16.gmra.mxu0 %v2042
      %v2068 = vpop.f32.mrf.mxu0
      %v2069 = vadd.f32 0.0, %v2068
      %v2070 = vpop.f32.mrf.mxu0
      %v2071 = vadd.f32 0.0, %v2070
      %2072 = vmatmul.bf16.gmra.mxu0 %v2045
      %v2073 = vpop.f32.mrf.mxu0
      %v2074 = vadd.f32 0.0, %v2073
      %v2075 = vpop.f32.mrf.mxu0
      %v2076 = vadd.f32 0.0, %v2075
      %2077 = vmatmul.bf16.gmra.mxu0 %v2048
      %v2078 = vpop.f32.mrf.mxu0
      %v2079 = vadd.f32 0.0, %v2078
      %v2080 = vpop.f32.mrf.mxu0
      %v2081 = vadd.f32 0.0, %v2080
      %2082 = vdwg.mxu0
      %v2091 = vunpack.c.l.b16 %v1990
      %v2092 = vunpack.c.l.b16 %v1991
      %v2093 = vunpack.c.l.b16 %v1992
      %v2094 = vunpack.c.l.b16 %v1993
      %v2095 = vunpack.c.l.b16 %v1994
      %v2096 = vunpack.c.l.b16 %v1995
      %v2097 = vunpack.c.l.b16 %v1996
      %v2098 = vunpack.c.l.b16 %v1997
      %v2099 = vpack.c.b16 %v2092, %v2091
      %v2100 = vpack.c.b16 %v2094, %v2093
      %v2101 = vpack.c.b16 %v2096, %v2095
      %v2102 = vpack.c.b16 %v2098, %v2097
      %v2104 = vsel %vm892, %v2099, 0
      %v2107 = vsel %vm892, %v2100, 0
      %v2110 = vsel %vm892, %v2101, 0
      %v2113 = vsel %vm892, %v2102, 0
      %v2116 = vsel %vm2050, %v2015, 0
      %2118 = vmatpush.bf16.msra.mxu0 0
      %2119 = vmatpush.bf16.msra.mxu0 0
      %2120 = vmatpush.bf16.msra.mxu0 0
      %2121 = vmatpush.bf16.msra.mxu0 0
      %2122 = vmatpush.bf16.msra.mxu0 0
      %2123 = vmatpush.bf16.msra.mxu0 0
      %2124 = vmatpush.bf16.msra.mxu0 0
      %2125 = vmatpush.bf16.msra.mxu0 %v2116
      %2126 = vmatmul.bf16.gmra.mxu0 %v2104
      %v2127 = vpop.f32.mrf.mxu0
      %v2128 = vadd.f32 0.0, %v2127
      %v2129 = vpop.f32.mrf.mxu0
      %v2130 = vadd.f32 0.0, %v2129
      %2131 = vmatmul.bf16.gmra.mxu0 %v2107
      %v2132 = vpop.f32.mrf.mxu0
      %v2133 = vadd.f32 0.0, %v2132
      %v2134 = vpop.f32.mrf.mxu0
      %v2135 = vadd.f32 0.0, %v2134
      %2136 = vmatmul.bf16.gmra.mxu0 %v2110
      %v2137 = vpop.f32.mrf.mxu0
      %v2138 = vadd.f32 0.0, %v2137
      %v2139 = vpop.f32.mrf.mxu0
      %v2140 = vadd.f32 0.0, %v2139
      %2141 = vmatmul.bf16.gmra.mxu0 %v2113
      %v2142 = vpop.f32.mrf.mxu0
      %v2143 = vadd.f32 0.0, %v2142
      %v2144 = vpop.f32.mrf.mxu0
      %v2145 = vadd.f32 0.0, %v2144
      %2146 = vdwg.mxu0
      %v2155 = vunpack.c.l.b16 %v1998
      %v2156 = vunpack.c.l.b16 %v1999
      %v2157 = vunpack.c.l.b16 %v2000
      %v2158 = vunpack.c.l.b16 %v2001
      %v2159 = vunpack.c.l.b16 %v2002
      %v2160 = vunpack.c.l.b16 %v2003
      %v2161 = vunpack.c.l.b16 %v2004
      %v2162 = vunpack.c.l.b16 %v2005
      %v2163 = vpack.c.b16 %v2156, %v2155
      %v2164 = vpack.c.b16 %v2158, %v2157
      %v2165 = vpack.c.b16 %v2160, %v2159
      %v2166 = vpack.c.b16 %v2162, %v2161
      %v2168 = vsel %vm892, %v2163, 0
      %v2171 = vsel %vm892, %v2164, 0
      %v2174 = vsel %vm892, %v2165, 0
      %v2177 = vsel %vm892, %v2166, 0
      %v2180 = vsel %vm2050, %v2016, 0
      %2182 = vmatpush.bf16.msra.mxu0 0
      %2183 = vmatpush.bf16.msra.mxu0 0
      %2184 = vmatpush.bf16.msra.mxu0 0
      %2185 = vmatpush.bf16.msra.mxu0 0
      %2186 = vmatpush.bf16.msra.mxu0 0
      %2187 = vmatpush.bf16.msra.mxu0 0
      %2188 = vmatpush.bf16.msra.mxu0 0
      %2189 = vmatpush.bf16.msra.mxu0 %v2180
      %2190 = vmatmul.bf16.gmra.mxu0 %v2168
      %v2191 = vpop.f32.mrf.mxu0
      %v2192 = vadd.f32 0.0, %v2191
      %v2193 = vpop.f32.mrf.mxu0
      %v2194 = vadd.f32 0.0, %v2193
      %2195 = vmatmul.bf16.gmra.mxu0 %v2171
      %v2196 = vpop.f32.mrf.mxu0
      %v2197 = vadd.f32 0.0, %v2196
      %v2198 = vpop.f32.mrf.mxu0
      %v2199 = vadd.f32 0.0, %v2198
      %2200 = vmatmul.bf16.gmra.mxu0 %v2174
      %v2201 = vpop.f32.mrf.mxu0
      %v2202 = vadd.f32 0.0, %v2201
      %v2203 = vpop.f32.mrf.mxu0
      %v2204 = vadd.f32 0.0, %v2203
      %2205 = vmatmul.bf16.gmra.mxu0 %v2177
      %v2206 = vpop.f32.mrf.mxu0
      %v2207 = vadd.f32 0.0, %v2206
      %v2208 = vpop.f32.mrf.mxu0
      %v2209 = vadd.f32 0.0, %v2208
      %2210 = vdwg.mxu0
      %v2219 = vunpack.c.l.b16 %v2006
      %v2220 = vunpack.c.l.b16 %v2007
      %v2221 = vunpack.c.l.b16 %v2008
      %v2222 = vunpack.c.l.b16 %v2009
      %v2223 = vunpack.c.l.b16 %v2010
      %v2224 = vunpack.c.l.b16 %v2011
      %v2225 = vunpack.c.l.b16 %v2012
      %v2226 = vunpack.c.l.b16 %v2013
      %v2227 = vpack.c.b16 %v2220, %v2219
      %v2228 = vpack.c.b16 %v2222, %v2221
      %v2229 = vpack.c.b16 %v2224, %v2223
      %v2230 = vpack.c.b16 %v2226, %v2225
      %v2232 = vsel %vm892, %v2227, 0
      %v2235 = vsel %vm892, %v2228, 0
      %v2238 = vsel %vm892, %v2229, 0
      %v2241 = vsel %vm892, %v2230, 0
      %v2244 = vsel %vm2050, %v2017, 0
      %2246 = vmatpush.bf16.msra.mxu0 0
      %2247 = vmatpush.bf16.msra.mxu0 0
      %2248 = vmatpush.bf16.msra.mxu0 0
      %2249 = vmatpush.bf16.msra.mxu0 0
      %2250 = vmatpush.bf16.msra.mxu0 0
      %2251 = vmatpush.bf16.msra.mxu0 0
      %2252 = vmatpush.bf16.msra.mxu0 0
      %2253 = vmatpush.bf16.msra.mxu0 %v2244
      %2254 = vmatmul.bf16.gmra.mxu0 %v2232
      %v2255 = vpop.f32.mrf.mxu0
      %v2256 = vadd.f32 0.0, %v2255
      %v2257 = vpop.f32.mrf.mxu0
      %v2258 = vadd.f32 0.0, %v2257
      %2259 = vmatmul.bf16.gmra.mxu0 %v2235
      %v2260 = vpop.f32.mrf.mxu0
      %v2261 = vadd.f32 0.0, %v2260
      %v2262 = vpop.f32.mrf.mxu0
      %v2263 = vadd.f32 0.0, %v2262
      %2264 = vmatmul.bf16.gmra.mxu0 %v2238
      %v2265 = vpop.f32.mrf.mxu0
      %v2266 = vadd.f32 0.0, %v2265
      %v2267 = vpop.f32.mrf.mxu0
      %v2268 = vadd.f32 0.0, %v2267
      %2269 = vmatmul.bf16.gmra.mxu0 %v2241
      %v2270 = vpop.f32.mrf.mxu0
      %v2271 = vadd.f32 0.0, %v2270
      %v2272 = vpop.f32.mrf.mxu0
      %v2273 = vadd.f32 0.0, %v2272
      %2274 = vdwg.mxu0
      %v2275 = vsel %vm295, %v2064, 0.0
      %v2276 = vsel %vm295, %v2128, 0.0
      %v2277 = vadd.f32 %v2275, %v2276
      %v2278 = vsel %vm295, %v2192, 0.0
      %v2279 = vadd.f32 %v2277, %v2278
      %v2280 = vsel %vm295, %v2256, 0.0
      %v2281 = vadd.f32 %v2279, %v2280
      %v2282 = vsel %vm295, %v2066, 0.0
      %v2283 = vsel %vm295, %v2130, 0.0
      %v2284 = vadd.f32 %v2282, %v2283
      %v2285 = vsel %vm295, %v2194, 0.0
      %v2286 = vadd.f32 %v2284, %v2285
      %v2287 = vsel %vm295, %v2258, 0.0
      %v2288 = vadd.f32 %v2286, %v2287
      %v2289 = vsel %vm295, %v2069, 0.0
      %v2290 = vsel %vm295, %v2133, 0.0
      %v2291 = vadd.f32 %v2289, %v2290
      %v2292 = vsel %vm295, %v2197, 0.0
      %v2293 = vadd.f32 %v2291, %v2292
      %v2294 = vsel %vm295, %v2261, 0.0
      %v2295 = vadd.f32 %v2293, %v2294
      %v2296 = vsel %vm295, %v2071, 0.0
      %v2297 = vsel %vm295, %v2135, 0.0
      %v2298 = vadd.f32 %v2296, %v2297
      %v2299 = vsel %vm295, %v2199, 0.0
      %v2300 = vadd.f32 %v2298, %v2299
      %v2301 = vsel %vm295, %v2263, 0.0
      %v2302 = vadd.f32 %v2300, %v2301
      %v2303 = vsel %vm295, %v2074, 0.0
      %v2304 = vsel %vm295, %v2138, 0.0
      %v2305 = vadd.f32 %v2303, %v2304
      %v2306 = vsel %vm295, %v2202, 0.0
      %v2307 = vadd.f32 %v2305, %v2306
      %v2308 = vsel %vm295, %v2266, 0.0
      %v2309 = vadd.f32 %v2307, %v2308
      %v2310 = vsel %vm295, %v2076, 0.0
      %v2311 = vsel %vm295, %v2140, 0.0
      %v2312 = vadd.f32 %v2310, %v2311
      %v2313 = vsel %vm295, %v2204, 0.0
      %v2314 = vadd.f32 %v2312, %v2313
      %v2315 = vsel %vm295, %v2268, 0.0
      %v2316 = vadd.f32 %v2314, %v2315
      %v2317 = vsel %vm295, %v2079, 0.0
      %v2318 = vsel %vm295, %v2143, 0.0
      %v2319 = vadd.f32 %v2317, %v2318
      %v2320 = vsel %vm295, %v2207, 0.0
      %v2321 = vadd.f32 %v2319, %v2320
      %v2322 = vsel %vm295, %v2271, 0.0
      %v2323 = vadd.f32 %v2321, %v2322
      %v2324 = vsel %vm295, %v2081, 0.0
      %v2325 = vsel %vm295, %v2145, 0.0
      %v2326 = vadd.f32 %v2324, %v2325
      %v2327 = vsel %vm295, %v2209, 0.0
      %v2328 = vadd.f32 %v2326, %v2327
      %v2329 = vsel %vm295, %v2273, 0.0
      %v2330 = vadd.f32 %v2328, %v2329
      %v2331 = vld [vmem:[%s3] sm:$0x1]
      %v2333 = vperm.slane %v2331, 0
      %v2335 = vadd.f32 %v2281, %v2333
      %v2336 = vadd.f32 %v2288, %v2333
      %v2337 = vadd.f32 %v2295, %v2333
      %v2338 = vadd.f32 %v2302, %v2333
      %v2339 = vadd.f32 %v2309, %v2333
      %v2340 = vadd.f32 %v2316, %v2333
      %v2341 = vadd.f32 %v2323, %v2333
      %v2342 = vadd.f32 %v2330, %v2333
      %2343 = vst.msk [vmem:[%s197] sm:$0xff] %vm295, %v2335
      %2344 = vst.msk [vmem:[%s197 + $0x8] sm:$0xff] %vm295, %v2336
      %2345 = vst.msk [vmem:[%s197 + $0x10] sm:$0xff] %vm295, %v2337
      %2346 = vst.msk [vmem:[%s197 + $0x18] sm:$0xff] %vm295, %v2338
      %2347 = vst.msk [vmem:[%s197 + $0x20] sm:$0xff] %vm295, %v2339
      %2348 = vst.msk [vmem:[%s197 + $0x28] sm:$0xff] %vm295, %v2340
      %2349 = vst.msk [vmem:[%s197 + $0x30] sm:$0xff] %vm295, %v2341
      %2350 = vst.msk [vmem:[%s197 + $0x38] sm:$0xff] %vm295, %v2342
      %p2351 = scmp.lt.s32.totalorder %s15, 1
      %s2352 = scalar_select %p2351, %s15, 1
      %s2353 = smul.addr %s2352, 8
      %s2354 = smul.addr %s2353, 8
      %s2355 = scalar_lea.vmem %s4, %s2354
      // Predicated region
      $region37: #{tpu_custom_call.1} parent=35 // pred_check
        %p2356 = pneg %p122
      $region38: #{tpu_custom_call.1} parent=35 // pred_check_branch
        %2358 = sbr.rel (%p2356) target = $region40
      $region39: #{tpu_custom_call.1} parent=35 // pred_region
        _
      $region40: #{tpu_custom_call.1} parent=35 // pred_fallthru
        _
    $region36: #{tpu_custom_call.1} parent=5 // pred_fallthru
      _
    %p2359 = scmp.le.s32.totalorder 2, %s10
    // Predicated region
    $region41: #{tpu_custom_call.1} parent=5 // pred_check
      %p2360 = pneg %p2359
    $region42: #{tpu_custom_call.1} parent=5 // pred_check_branch
      %2362 = sbr.rel (%p2360) target = $region44
    $region43: #{tpu_custom_call.1} parent=5 // pred_region
      %s2363 = ssub.s32 %s10, 2
      // Predicated region
      $region45: #{tpu_custom_call.1} parent=43 // pred_check
        %p2364 = pneg %p128
      $region46: #{tpu_custom_call.1} parent=43 // pred_check_branch
        %2366 = sbr.rel (%p2364) target = $region48
      $region47: #{tpu_custom_call.1} parent=43 // pred_region
        %p2367 = scmp.lt.s32.totalorder %s16, 1
        %s2368 = scalar_select %p2367, %s16, 1
        %s2369 = smul.addr %s2368, 8
        %s2370 = smul.addr %s2369, 8
        %s2371 = scalar_lea.vmem %s4, %s2370
      $region48: #{tpu_custom_call.1} parent=43 // pred_fallthru
        _
    $region44: #{tpu_custom_call.1} parent=5 // pred_fallthru
      _
  $region6: #{tpu_custom_call.1} parent=0 // loop_footer
    %s14 = sadd.s32 1, %s10
  $region7: #{tpu_custom_call.1} parent=0 // loop_footer_branch
    %9 = sbr.rel target = $region3
  $region8: #{tpu_custom_call.1} parent=0 // loop_exit
    _

</llo_original>
